<compile_context>
chip_gen: v7x
topology: tpu7x:2x2x1
jax: 0.10.0
libtpu: 0.0.40
codegen_flags: <defaults>
</compile_context>

<pallas_src>
import functools

import jax
import jax.numpy as jnp
from jax.experimental import pallas as pl
from jax.experimental.pallas import tpu as pltpu

# ----- hyperparameters matching the PyTorch script -----
BATCH = 1
EMBED = 70
HIDDEN = 100
NUM_LAYERS = 1
N_CHARS = 100          # input_size == output_size

# ----- padded (lane-aligned) layout constants -----
HP = 128               # hidden padded to one 128-lane chunk
GP = 128               # each LSTM gate padded to its own 128-lane chunk
NC_PAD = 128           # vocab / decoder output padded
T_BLOCK = 8            # timesteps processed per grid iteration (sublane-aligned)


def _lstm_block_kernel(seq_len,                       # static: true sequence length
                       tok_ref,                       # scalar-prefetch: (seq_pad,) int32 in SMEM
                       xg_ref, h0_ref, c0_ref,        # resident inputs
                       whh_ref, wdec_ref, bdec_ref,
                       out_ref, h_ref, c_ref):        # outputs (h/c resident = recurrent carry)
    g = pl.program_id(0)

    @pl.when(g == 0)
    def _():
        h_ref[...] = h0_ref[...]
        c_ref[...] = c0_ref[...]

    h = h_ref[...]                                    # (1, HP)
    c = c_ref[...]                                    # (1, HP)
    base = g * T_BLOCK

    h_rows = []
    # Static unroll: lets the scheduler overlap off-chain work (gather of the
    # next token's xg row, decoder prep) under the serial h @ W_hh chain.
    for s in range(T_BLOCK):
        tok = tok_ref[base + s]
        # Precomputed input-gate contribution: emb[tok] @ W_ih^T + b_ih + b_hh.
        xg = xg_ref[pl.ds(tok, 1), :]                 # (1, 4*GP)
        gates = jnp.dot(h, whh_ref[...], preferred_element_type=jnp.float32) + xg

        # PyTorch gate order i, f, g, o -- each gate in its own 128-lane chunk.
        i_g = jax.nn.sigmoid(gates[:, 0 * GP:1 * GP])
        f_g = jax.nn.sigmoid(gates[:, 1 * GP:2 * GP])
        g_g = jnp.tanh(gates[:, 2 * GP:3 * GP])
        o_g = jax.nn.sigmoid(gates[:, 3 * GP:4 * GP])

        c_new = f_g * c + i_g * g_g
        h_new = o_g * jnp.tanh(c_new)

        # Mask padded tail steps so the carried h/c stay exact at step seq_len-1.
        valid = (base + s) < seq_len
        c = jnp.where(valid, c_new, c)
        h = jnp.where(valid, h_new, h)
        h_rows.append(h)

    h_ref[...] = h
    c_ref[...] = c

    # Batched decoder (off the recurrence critical path): one (T,128)@(128,128)
    # matmul and one full (8,128) unmasked block store per grid iteration.
    hs = jnp.concatenate(h_rows, axis=0)              # (T_BLOCK, HP)
    out_ref[...] = (jnp.dot(hs, wdec_ref[...], preferred_element_type=jnp.float32)
                    + bdec_ref[...])


def rnn_forward_seq(params, tokens, hidden, cell):
    """Run the Embedding->LSTM->Linear stack over a whole token sequence.

    tokens : (seq,) int32
    hidden, cell : (num_layers=1, batch=1, HIDDEN)
    returns (out (seq, N_CHARS), hidden (1,1,HIDDEN), cell (1,1,HIDDEN))
    Applying it to a length-1 sequence reproduces the PyTorch forward().
    """
    tokens = tokens.reshape(-1).astype(jnp.int32)
    seq = int(tokens.shape[0])
    n_blocks = pl.cdiv(seq, T_BLOCK)
    seq_pad = n_blocks * T_BLOCK
    if seq_pad != seq:
        tokens = jnp.pad(tokens, (0, seq_pad - seq))  # padded steps are masked in-kernel

    h0 = jnp.pad(hidden.reshape(BATCH, HIDDEN), ((0, 0), (0, HP - HIDDEN)))
    c0 = jnp.pad(cell.reshape(BATCH, HIDDEN), ((0, 0), (0, HP - HIDDEN)))

    const = lambda g, tok: (0, 0)   # resident blocks (DMA'd once, no re-fetch)

    out_pad, h_pad, c_pad = pl.pallas_call(
        functools.partial(_lstm_block_kernel, seq),
        grid_spec=pltpu.PrefetchScalarGridSpec(
            num_scalar_prefetch=1,
            grid=(n_blocks,),
            in_specs=[
                pl.BlockSpec((NC_PAD, 4 * GP), const),   # xg_table (per-token gate rows)
                pl.BlockSpec((1, HP), const),            # h0
                pl.BlockSpec((1, HP), const),            # c0
                pl.BlockSpec((HP, 4 * GP), const),       # packed W_hh (gate chunks)
                pl.BlockSpec((HP, NC_PAD), const),       # decoder weight
                pl.BlockSpec((1, NC_PAD), const),        # decoder bias
            ],
            out_specs=[
                pl.BlockSpec((T_BLOCK, NC_PAD), lambda g, tok: (g, 0)),  # per-block logits
                pl.BlockSpec((1, HP), const),                            # final h (carry)
                pl.BlockSpec((1, HP), const),                            # final c (carry)
            ],
        ),
        out_shape=[
            jax.ShapeDtypeStruct((seq_pad, NC_PAD), jnp.float32),
            jax.ShapeDtypeStruct((1, HP), jnp.float32),
            jax.ShapeDtypeStruct((1, HP), jnp.float32),
        ],
        compiler_params=pltpu.CompilerParams(dimension_semantics=("arbitrary",)),
    )(tokens,
      params["xg_table"], h0, c0,
      params["w_hh_packed"], params["w_dec_pad"], params["b_dec_pad"])

    out = out_pad[:seq, :N_CHARS]
    h_new = h_pad[:, :HIDDEN].reshape(NUM_LAYERS, BATCH, HIDDEN)
    c_new = c_pad[:, :HIDDEN].reshape(NUM_LAYERS, BATCH, HIDDEN)
    return out, h_new, c_new


def rnn_forward(params, token, hidden, cell):
    """Single-token API matching PyTorch RNN.forward(input, hidden, cell)."""
    out, h_new, c_new = rnn_forward_seq(params, token.reshape(-1), hidden, cell)
    return out.reshape(BATCH, N_CHARS), h_new, c_new


def init_params(key):
    keys = jax.random.split(key, 7)
    bound = 1.0 / (HIDDEN ** 0.5)

    def u(k, shape, b):
        return jax.random.uniform(k, shape, jnp.float32, -b, b)

    # Raw PyTorch-layout parameters (used by the reference).
    embedding = jax.random.normal(keys[0], (N_CHARS, EMBED), jnp.float32)   # nn.Embedding ~ N(0,1)
    w_ih = u(keys[1], (4 * HIDDEN, EMBED), bound)    # weight_ih_l0
    w_hh = u(keys[2], (4 * HIDDEN, HIDDEN), bound)   # weight_hh_l0
    b_ih = u(keys[3], (4 * HIDDEN,), bound)
    b_hh = u(keys[4], (4 * HIDDEN,), bound)
    w_dec = u(keys[5], (N_CHARS, HIDDEN), bound)     # nn.Linear(hidden, output)
    b_dec = u(keys[6], (N_CHARS,), bound)

    # ---- packed / lane-padded layouts for the Pallas kernel ----
    # xg_table[tok, g*GP : g*GP+H] = emb[tok] @ W_ih_g^T + (b_ih_g + b_hh_g)
    xg_table = jnp.zeros((NC_PAD, 4 * GP), jnp.float32)
    w_hh_packed = jnp.zeros((HP, 4 * GP), jnp.float32)
    for g in range(4):
        wi = w_ih[g * HIDDEN:(g + 1) * HIDDEN, :]                       # (H, E)
        wh = w_hh[g * HIDDEN:(g + 1) * HIDDEN, :]                       # (H, H)
        bb = b_ih[g * HIDDEN:(g + 1) * HIDDEN] + b_hh[g * HIDDEN:(g + 1) * HIDDEN]
        xg = jnp.dot(embedding, wi.T,
                     precision=jax.lax.Precision.HIGHEST) + bb          # (N_CHARS, H)
        xg_table = xg_table.at[:N_CHARS, g * GP:g * GP + HIDDEN].set(xg)
        w_hh_packed = w_hh_packed.at[:HIDDEN, g * GP:g * GP + HIDDEN].set(wh.T)

    w_dec_pad = jnp.zeros((HP, NC_PAD), jnp.float32).at[:HIDDEN, :N_CHARS].set(w_dec.T)
    b_dec_pad = jnp.zeros((1, NC_PAD), jnp.float32).at[0, :N_CHARS].set(b_dec)

    return dict(
        embedding=embedding, w_ih=w_ih, w_hh=w_hh, b_ih=b_ih, b_hh=b_hh,
        w_dec=w_dec, b_dec=b_dec,
        xg_table=xg_table, w_hh_packed=w_hh_packed,
        w_dec_pad=w_dec_pad, b_dec_pad=b_dec_pad,
    )


def rnn_forward_seq_ref(params, tokens, hidden, cell):
    """Pure-JAX reference (unfused, unpadded) for correctness checking."""
    tokens = tokens.reshape(-1)
    h = hidden.reshape(BATCH, HIDDEN)
    c = cell.reshape(BATCH, HIDDEN)
    H = HIDDEN
    outs = []
    for t in range(tokens.shape[0]):
        x = params["embedding"][tokens[t]].reshape(1, EMBED)
        gates = (x @ params["w_ih"].T + h @ params["w_hh"].T
                 + params["b_ih"] + params["b_hh"])
        i_g = jax.nn.sigmoid(gates[:, 0 * H:1 * H])
        f_g = jax.nn.sigmoid(gates[:, 1 * H:2 * H])
        g_g = jnp.tanh(gates[:, 2 * H:3 * H])
        o_g = jax.nn.sigmoid(gates[:, 3 * H:4 * H])
        c = f_g * c + i_g * g_g
        h = o_g * jnp.tanh(c)
        outs.append(h @ params["w_dec"].T + params["b_dec"])
    out = jnp.concatenate(outs, axis=0)
    return out, h.reshape(NUM_LAYERS, BATCH, HIDDEN), c.reshape(NUM_LAYERS, BATCH, HIDDEN)


if __name__ == "__main__":
    params = init_params(jax.random.PRNGKey(0))

    SEQ = 8
    k1, k2, k3 = jax.random.split(jax.random.PRNGKey(1), 3)
    tokens = jax.random.randint(k1, (SEQ,), 0, N_CHARS, dtype=jnp.int32)
    hidden = 0.1 * jax.random.normal(k2, (NUM_LAYERS, BATCH, HIDDEN), jnp.float32)
    cell = 0.1 * jax.random.normal(k3, (NUM_LAYERS, BATCH, HIDDEN), jnp.float32)

    # Sequence-mode run (one pallas_call, one grid step for all 8 tokens).
    out, h_new, c_new = rnn_forward_seq(params, tokens, hidden, cell)
    jax.block_until_ready((out, h_new, c_new))

    out_r, h_r, c_r = rnn_forward_seq_ref(params, tokens, hidden, cell)
    assert out.shape == (SEQ, N_CHARS)
    assert h_new.shape == (NUM_LAYERS, BATCH, HIDDEN)
    assert c_new.shape == (NUM_LAYERS, BATCH, HIDDEN)
    assert jnp.allclose(out, out_r, atol=1e-4), "decoder output mismatch"
    assert jnp.allclose(h_new, h_r, atol=1e-4), "hidden mismatch"
    assert jnp.allclose(c_new, c_r, atol=1e-4), "cell mismatch"

    # Single-token API parity with PyTorch forward(input, hidden, cell)
    # (seq=1 exercises the padded/masked tail path).
    zeros_h = jnp.zeros((NUM_LAYERS, BATCH, HIDDEN), jnp.float32)
    zeros_c = jnp.zeros((NUM_LAYERS, BATCH, HIDDEN), jnp.float32)
    out1, h1, c1 = rnn_forward(params, tokens[:1].reshape(1, 1), zeros_h, zeros_c)
    jax.block_until_ready((out1, h1, c1))
    out1_r, h1_r, c1_r = rnn_forward_seq_ref(params, tokens[:1], zeros_h, zeros_c)
    assert out1.shape == (BATCH, N_CHARS)
    assert jnp.allclose(out1, out1_r, atol=1e-4), "single-step output mismatch"
    assert jnp.allclose(h1, h1_r, atol=1e-4), "single-step hidden mismatch"
    assert jnp.allclose(c1, c1_r, atol=1e-4), "single-step cell mismatch"

    print("KERNEL_OK")
</pallas_src>

<mosaic_0001>
module attributes {stable_mosaic.version = 11 : i64} {
  func.func @_lstm_block_kernel(%arg0: i32, %arg1: memref<8xi32, #tpu.memory_space<smem>>, %arg2: memref<128x512xf32, #tpu.memory_space<vmem>>, %arg3: memref<1x128xf32, #tpu.memory_space<vmem>>, %arg4: memref<1x128xf32, #tpu.memory_space<vmem>>, %arg5: memref<128x512xf32, #tpu.memory_space<vmem>>, %arg6: memref<128x128xf32, #tpu.memory_space<vmem>>, %arg7: memref<1x128xf32, #tpu.memory_space<vmem>>, %arg8: memref<8x128xf32, #tpu.memory_space<vmem>>, %arg9: memref<1x128xf32, #tpu.memory_space<vmem>>, %arg10: memref<1x128xf32, #tpu.memory_space<vmem>>) attributes {dimension_semantics = [#tpu.dimension_semantics<arbitrary>], iteration_bounds = array<i64: 1>, scalar_prefetch = 1 : i64, scratch_operands = 0 : i64, tpu.core_type = #tpu.core_type<tc>, window_params = [{pipeline_mode = #tpu.pipeline_mode<synchronous>, transform_indices = @transform_0, window_bounds = array<i64: 128, 512>}, {pipeline_mode = #tpu.pipeline_mode<synchronous>, transform_indices = @transform_1, window_bounds = array<i64: 1, 128>}, {pipeline_mode = #tpu.pipeline_mode<synchronous>, transform_indices = @transform_2, window_bounds = array<i64: 1, 128>}, {pipeline_mode = #tpu.pipeline_mode<synchronous>, transform_indices = @transform_3, window_bounds = array<i64: 128, 512>}, {pipeline_mode = #tpu.pipeline_mode<synchronous>, transform_indices = @transform_4, window_bounds = array<i64: 128, 128>}, {pipeline_mode = #tpu.pipeline_mode<synchronous>, transform_indices = @transform_5, window_bounds = array<i64: 1, 128>}, {transform_indices = @transform_6, window_bounds = array<i64: 8, 128>}, {pipeline_mode = #tpu.pipeline_mode<synchronous>, transform_indices = @transform_7, window_bounds = array<i64: 1, 128>}, {pipeline_mode = #tpu.pipeline_mode<synchronous>, transform_indices = @transform_8, window_bounds = array<i64: 1, 128>}]} {
    %c0_i32 = arith.constant 0 : i32
    %0 = arith.cmpi eq, %arg0, %c0_i32 : i32
    %1 = arith.extui %0 : i1 to i32
    %c0_i32_0 = arith.constant 0 : i32
    %2 = arith.cmpi ne, %1, %c0_i32_0 : i32
    scf.if %2 {
      %c0_87 = arith.constant 0 : index
      %c0_88 = arith.constant 0 : index
      %311 = vector.load %arg3[%c0_87, %c0_88] : memref<1x128xf32, #tpu.memory_space<vmem>>, vector<1x128xf32>
      %c0_89 = arith.constant 0 : index
      %c0_90 = arith.constant 0 : index
      %312 = vector.load %arg9[%c0_89, %c0_90] : memref<1x128xf32, #tpu.memory_space<vmem>>, vector<1x128xf32>
      tpu.vector_store %arg9[%c0_89, %c0_90], %311 {strides = array<i32>} : memref<1x128xf32, #tpu.memory_space<vmem>>, vector<1x128xf32>,
      %c0_91 = arith.constant 0 : index
      %c0_92 = arith.constant 0 : index
      %313 = vector.load %arg4[%c0_91, %c0_92] : memref<1x128xf32, #tpu.memory_space<vmem>>, vector<1x128xf32>
      %c0_93 = arith.constant 0 : index
      %c0_94 = arith.constant 0 : index
      %314 = vector.load %arg10[%c0_93, %c0_94] : memref<1x128xf32, #tpu.memory_space<vmem>>, vector<1x128xf32>
      tpu.vector_store %arg10[%c0_93, %c0_94], %313 {strides = array<i32>} : memref<1x128xf32, #tpu.memory_space<vmem>>, vector<1x128xf32>,
    } else {
    }
    %c0 = arith.constant 0 : index
    %c0_1 = arith.constant 0 : index
    %3 = vector.load %arg9[%c0, %c0_1] : memref<1x128xf32, #tpu.memory_space<vmem>>, vector<1x128xf32>
    %c0_2 = arith.constant 0 : index
    %c0_3 = arith.constant 0 : index
    %4 = vector.load %arg10[%c0_2, %c0_3] : memref<1x128xf32, #tpu.memory_space<vmem>>, vector<1x128xf32>
    %c8_i32 = arith.constant 8 : i32
    %5 = arith.muli %arg0, %c8_i32 : i32
    %c0_i32_4 = arith.constant 0 : i32
    %6 = arith.addi %5, %c0_i32_4 : i32
    %7 = arith.index_cast %6 : i32 to index
    %8 = memref.load %arg1[%7] : memref<8xi32, #tpu.memory_space<smem>>
    %9 = arith.index_cast %8 : i32 to index
    %c0_5 = arith.constant 0 : index
    %10 = vector.load %arg2[%9, %c0_5] : memref<128x512xf32, #tpu.memory_space<vmem>>, vector<1x512xf32>
    %c0_6 = arith.constant 0 : index
    %c0_7 = arith.constant 0 : index
    %11 = vector.load %arg5[%c0_6, %c0_7] : memref<128x512xf32, #tpu.memory_space<vmem>>, vector<128x512xf32>
    %cst = arith.constant dense<0.000000e+00> : vector<1x512xf32>
    %12 = tpu.matmul %3, %11, %cst {dimension_numbers = #tpu.dot_dimension_numbers<[1], [0], [0], [1], [0, 0, 1, 1], [], []>} : vector<1x128xf32>, vector<128x512xf32>, vector<1x512xf32> -> vector<1x512xf32>
    %13 = arith.addf %12, %10 : vector<1x512xf32>
    %14 = vector.extract_strided_slice %13 {offsets = [0, 0], sizes = [1, 128], strides = [1, 1]} : vector<1x512xf32> to vector<1x128xf32>
    %15 = arith.negf %14 : vector<1x128xf32>
    %16 = math.exp %15 : vector<1x128xf32>
    %cst_8 = arith.constant 1.000000e+00 : f32
    %17 = vector.broadcast %cst_8 : f32 to vector<1x128xf32>
    %18 = arith.addf %17, %16 : vector<1x128xf32>
    %19 = arith.divf %17, %18 : vector<1x128xf32>
    %20 = vector.extract_strided_slice %13 {offsets = [0, 128], sizes = [1, 128], strides = [1, 1]} : vector<1x512xf32> to vector<1x128xf32>
    %21 = arith.negf %20 : vector<1x128xf32>
    %22 = math.exp %21 : vector<1x128xf32>
    %cst_9 = arith.constant 1.000000e+00 : f32
    %23 = vector.broadcast %cst_9 : f32 to vector<1x128xf32>
    %24 = arith.addf %23, %22 : vector<1x128xf32>
    %25 = arith.divf %23, %24 : vector<1x128xf32>
    %26 = vector.extract_strided_slice %13 {offsets = [0, 256], sizes = [1, 128], strides = [1, 1]} : vector<1x512xf32> to vector<1x128xf32>
    %27 = math.tanh %26 : vector<1x128xf32>
    %28 = vector.extract_strided_slice %13 {offsets = [0, 384], sizes = [1, 128], strides = [1, 1]} : vector<1x512xf32> to vector<1x128xf32>
    %29 = arith.negf %28 : vector<1x128xf32>
    %30 = math.exp %29 : vector<1x128xf32>
    %cst_10 = arith.constant 1.000000e+00 : f32
    %31 = vector.broadcast %cst_10 : f32 to vector<1x128xf32>
    %32 = arith.addf %31, %30 : vector<1x128xf32>
    %33 = arith.divf %31, %32 : vector<1x128xf32>
    %34 = arith.mulf %25, %4 : vector<1x128xf32>
    %35 = arith.mulf %19, %27 : vector<1x128xf32>
    %36 = arith.addf %34, %35 : vector<1x128xf32>
    %37 = math.tanh %36 : vector<1x128xf32>
    %38 = arith.mulf %33, %37 : vector<1x128xf32>
    %c0_i32_11 = arith.constant 0 : i32
    %39 = arith.addi %5, %c0_i32_11 : i32
    %c8_i32_12 = arith.constant 8 : i32
    %40 = arith.cmpi slt, %39, %c8_i32_12 : i32
    %41 = arith.select %40, %36, %4 : vector<1x128xf32>
    %42 = arith.select %40, %38, %3 : vector<1x128xf32>
    %c1_i32 = arith.constant 1 : i32
    %43 = arith.addi %5, %c1_i32 : i32
    %44 = arith.index_cast %43 : i32 to index
    %45 = memref.load %arg1[%44] : memref<8xi32, #tpu.memory_space<smem>>
    %46 = arith.index_cast %45 : i32 to index
    %c0_13 = arith.constant 0 : index
    %47 = vector.load %arg2[%46, %c0_13] : memref<128x512xf32, #tpu.memory_space<vmem>>, vector<1x512xf32>
    %c0_14 = arith.constant 0 : index
    %c0_15 = arith.constant 0 : index
    %48 = vector.load %arg5[%c0_14, %c0_15] : memref<128x512xf32, #tpu.memory_space<vmem>>, vector<128x512xf32>
    %cst_16 = arith.constant dense<0.000000e+00> : vector<1x512xf32>
    %49 = tpu.matmul %42, %48, %cst_16 {dimension_numbers = #tpu.dot_dimension_numbers<[1], [0], [0], [1], [0, 0, 1, 1], [], []>} : vector<1x128xf32>, vector<128x512xf32>, vector<1x512xf32> -> vector<1x512xf32>
    %50 = arith.addf %49, %47 : vector<1x512xf32>
    %51 = vector.extract_strided_slice %50 {offsets = [0, 0], sizes = [1, 128], strides = [1, 1]} : vector<1x512xf32> to vector<1x128xf32>
    %52 = arith.negf %51 : vector<1x128xf32>
    %53 = math.exp %52 : vector<1x128xf32>
    %cst_17 = arith.constant 1.000000e+00 : f32
    %54 = vector.broadcast %cst_17 : f32 to vector<1x128xf32>
    %55 = arith.addf %54, %53 : vector<1x128xf32>
    %56 = arith.divf %54, %55 : vector<1x128xf32>
    %57 = vector.extract_strided_slice %50 {offsets = [0, 128], sizes = [1, 128], strides = [1, 1]} : vector<1x512xf32> to vector<1x128xf32>
    %58 = arith.negf %57 : vector<1x128xf32>
    %59 = math.exp %58 : vector<1x128xf32>
    %cst_18 = arith.constant 1.000000e+00 : f32
    %60 = vector.broadcast %cst_18 : f32 to vector<1x128xf32>
    %61 = arith.addf %60, %59 : vector<1x128xf32>
    %62 = arith.divf %60, %61 : vector<1x128xf32>
    %63 = vector.extract_strided_slice %50 {offsets = [0, 256], sizes = [1, 128], strides = [1, 1]} : vector<1x512xf32> to vector<1x128xf32>
    %64 = math.tanh %63 : vector<1x128xf32>
    %65 = vector.extract_strided_slice %50 {offsets = [0, 384], sizes = [1, 128], strides = [1, 1]} : vector<1x512xf32> to vector<1x128xf32>
    %66 = arith.negf %65 : vector<1x128xf32>
    %67 = math.exp %66 : vector<1x128xf32>
    %cst_19 = arith.constant 1.000000e+00 : f32
    %68 = vector.broadcast %cst_19 : f32 to vector<1x128xf32>
    %69 = arith.addf %68, %67 : vector<1x128xf32>
    %70 = arith.divf %68, %69 : vector<1x128xf32>
    %71 = arith.mulf %62, %41 : vector<1x128xf32>
    %72 = arith.mulf %56, %64 : vector<1x128xf32>
    %73 = arith.addf %71, %72 : vector<1x128xf32>
    %74 = math.tanh %73 : vector<1x128xf32>
    %75 = arith.mulf %70, %74 : vector<1x128xf32>
    %c1_i32_20 = arith.constant 1 : i32
    %76 = arith.addi %5, %c1_i32_20 : i32
    %c8_i32_21 = arith.constant 8 : i32
    %77 = arith.cmpi slt, %76, %c8_i32_21 : i32
    %78 = arith.select %77, %73, %41 : vector<1x128xf32>
    %79 = arith.select %77, %75, %42 : vector<1x128xf32>
    %c2_i32 = arith.constant 2 : i32
    %80 = arith.addi %5, %c2_i32 : i32
    %81 = arith.index_cast %80 : i32 to index
    %82 = memref.load %arg1[%81] : memref<8xi32, #tpu.memory_space<smem>>
    %83 = arith.index_cast %82 : i32 to index
    %c0_22 = arith.constant 0 : index
    %84 = vector.load %arg2[%83, %c0_22] : memref<128x512xf32, #tpu.memory_space<vmem>>, vector<1x512xf32>
    %c0_23 = arith.constant 0 : index
    %c0_24 = arith.constant 0 : index
    %85 = vector.load %arg5[%c0_23, %c0_24] : memref<128x512xf32, #tpu.memory_space<vmem>>, vector<128x512xf32>
    %cst_25 = arith.constant dense<0.000000e+00> : vector<1x512xf32>
    %86 = tpu.matmul %79, %85, %cst_25 {dimension_numbers = #tpu.dot_dimension_numbers<[1], [0], [0], [1], [0, 0, 1, 1], [], []>} : vector<1x128xf32>, vector<128x512xf32>, vector<1x512xf32> -> vector<1x512xf32>
    %87 = arith.addf %86, %84 : vector<1x512xf32>
    %88 = vector.extract_strided_slice %87 {offsets = [0, 0], sizes = [1, 128], strides = [1, 1]} : vector<1x512xf32> to vector<1x128xf32>
    %89 = arith.negf %88 : vector<1x128xf32>
    %90 = math.exp %89 : vector<1x128xf32>
    %cst_26 = arith.constant 1.000000e+00 : f32
    %91 = vector.broadcast %cst_26 : f32 to vector<1x128xf32>
    %92 = arith.addf %91, %90 : vector<1x128xf32>
    %93 = arith.divf %91, %92 : vector<1x128xf32>
    %94 = vector.extract_strided_slice %87 {offsets = [0, 128], sizes = [1, 128], strides = [1, 1]} : vector<1x512xf32> to vector<1x128xf32>
    %95 = arith.negf %94 : vector<1x128xf32>
    %96 = math.exp %95 : vector<1x128xf32>
    %cst_27 = arith.constant 1.000000e+00 : f32
    %97 = vector.broadcast %cst_27 : f32 to vector<1x128xf32>
    %98 = arith.addf %97, %96 : vector<1x128xf32>
    %99 = arith.divf %97, %98 : vector<1x128xf32>
    %100 = vector.extract_strided_slice %87 {offsets = [0, 256], sizes = [1, 128], strides = [1, 1]} : vector<1x512xf32> to vector<1x128xf32>
    %101 = math.tanh %100 : vector<1x128xf32>
    %102 = vector.extract_strided_slice %87 {offsets = [0, 384], sizes = [1, 128], strides = [1, 1]} : vector<1x512xf32> to vector<1x128xf32>
    %103 = arith.negf %102 : vector<1x128xf32>
    %104 = math.exp %103 : vector<1x128xf32>
    %cst_28 = arith.constant 1.000000e+00 : f32
    %105 = vector.broadcast %cst_28 : f32 to vector<1x128xf32>
    %106 = arith.addf %105, %104 : vector<1x128xf32>
    %107 = arith.divf %105, %106 : vector<1x128xf32>
    %108 = arith.mulf %99, %78 : vector<1x128xf32>
    %109 = arith.mulf %93, %101 : vector<1x128xf32>
    %110 = arith.addf %108, %109 : vector<1x128xf32>
    %111 = math.tanh %110 : vector<1x128xf32>
    %112 = arith.mulf %107, %111 : vector<1x128xf32>
    %c2_i32_29 = arith.constant 2 : i32
    %113 = arith.addi %5, %c2_i32_29 : i32
    %c8_i32_30 = arith.constant 8 : i32
    %114 = arith.cmpi slt, %113, %c8_i32_30 : i32
    %115 = arith.select %114, %110, %78 : vector<1x128xf32>
    %116 = arith.select %114, %112, %79 : vector<1x128xf32>
    %c3_i32 = arith.constant 3 : i32
    %117 = arith.addi %5, %c3_i32 : i32
    %118 = arith.index_cast %117 : i32 to index
    %119 = memref.load %arg1[%118] : memref<8xi32, #tpu.memory_space<smem>>
    %120 = arith.index_cast %119 : i32 to index
    %c0_31 = arith.constant 0 : index
    %121 = vector.load %arg2[%120, %c0_31] : memref<128x512xf32, #tpu.memory_space<vmem>>, vector<1x512xf32>
    %c0_32 = arith.constant 0 : index
    %c0_33 = arith.constant 0 : index
    %122 = vector.load %arg5[%c0_32, %c0_33] : memref<128x512xf32, #tpu.memory_space<vmem>>, vector<128x512xf32>
    %cst_34 = arith.constant dense<0.000000e+00> : vector<1x512xf32>
    %123 = tpu.matmul %116, %122, %cst_34 {dimension_numbers = #tpu.dot_dimension_numbers<[1], [0], [0], [1], [0, 0, 1, 1], [], []>} : vector<1x128xf32>, vector<128x512xf32>, vector<1x512xf32> -> vector<1x512xf32>
    %124 = arith.addf %123, %121 : vector<1x512xf32>
    %125 = vector.extract_strided_slice %124 {offsets = [0, 0], sizes = [1, 128], strides = [1, 1]} : vector<1x512xf32> to vector<1x128xf32>
    %126 = arith.negf %125 : vector<1x128xf32>
    %127 = math.exp %126 : vector<1x128xf32>
    %cst_35 = arith.constant 1.000000e+00 : f32
    %128 = vector.broadcast %cst_35 : f32 to vector<1x128xf32>
    %129 = arith.addf %128, %127 : vector<1x128xf32>
    %130 = arith.divf %128, %129 : vector<1x128xf32>
    %131 = vector.extract_strided_slice %124 {offsets = [0, 128], sizes = [1, 128], strides = [1, 1]} : vector<1x512xf32> to vector<1x128xf32>
    %132 = arith.negf %131 : vector<1x128xf32>
    %133 = math.exp %132 : vector<1x128xf32>
    %cst_36 = arith.constant 1.000000e+00 : f32
    %134 = vector.broadcast %cst_36 : f32 to vector<1x128xf32>
    %135 = arith.addf %134, %133 : vector<1x128xf32>
    %136 = arith.divf %134, %135 : vector<1x128xf32>
    %137 = vector.extract_strided_slice %124 {offsets = [0, 256], sizes = [1, 128], strides = [1, 1]} : vector<1x512xf32> to vector<1x128xf32>
    %138 = math.tanh %137 : vector<1x128xf32>
    %139 = vector.extract_strided_slice %124 {offsets = [0, 384], sizes = [1, 128], strides = [1, 1]} : vector<1x512xf32> to vector<1x128xf32>
    %140 = arith.negf %139 : vector<1x128xf32>
    %141 = math.exp %140 : vector<1x128xf32>
    %cst_37 = arith.constant 1.000000e+00 : f32
    %142 = vector.broadcast %cst_37 : f32 to vector<1x128xf32>
    %143 = arith.addf %142, %141 : vector<1x128xf32>
    %144 = arith.divf %142, %143 : vector<1x128xf32>
    %145 = arith.mulf %136, %115 : vector<1x128xf32>
    %146 = arith.mulf %130, %138 : vector<1x128xf32>
    %147 = arith.addf %145, %146 : vector<1x128xf32>
    %148 = math.tanh %147 : vector<1x128xf32>
    %149 = arith.mulf %144, %148 : vector<1x128xf32>
    %c3_i32_38 = arith.constant 3 : i32
    %150 = arith.addi %5, %c3_i32_38 : i32
    %c8_i32_39 = arith.constant 8 : i32
    %151 = arith.cmpi slt, %150, %c8_i32_39 : i32
    %152 = arith.select %151, %147, %115 : vector<1x128xf32>
    %153 = arith.select %151, %149, %116 : vector<1x128xf32>
    %c4_i32 = arith.constant 4 : i32
    %154 = arith.addi %5, %c4_i32 : i32
    %155 = arith.index_cast %154 : i32 to index
    %156 = memref.load %arg1[%155] : memref<8xi32, #tpu.memory_space<smem>>
    %157 = arith.index_cast %156 : i32 to index
    %c0_40 = arith.constant 0 : index
    %158 = vector.load %arg2[%157, %c0_40] : memref<128x512xf32, #tpu.memory_space<vmem>>, vector<1x512xf32>
    %c0_41 = arith.constant 0 : index
    %c0_42 = arith.constant 0 : index
    %159 = vector.load %arg5[%c0_41, %c0_42] : memref<128x512xf32, #tpu.memory_space<vmem>>, vector<128x512xf32>
    %cst_43 = arith.constant dense<0.000000e+00> : vector<1x512xf32>
    %160 = tpu.matmul %153, %159, %cst_43 {dimension_numbers = #tpu.dot_dimension_numbers<[1], [0], [0], [1], [0, 0, 1, 1], [], []>} : vector<1x128xf32>, vector<128x512xf32>, vector<1x512xf32> -> vector<1x512xf32>
    %161 = arith.addf %160, %158 : vector<1x512xf32>
    %162 = vector.extract_strided_slice %161 {offsets = [0, 0], sizes = [1, 128], strides = [1, 1]} : vector<1x512xf32> to vector<1x128xf32>
    %163 = arith.negf %162 : vector<1x128xf32>
    %164 = math.exp %163 : vector<1x128xf32>
    %cst_44 = arith.constant 1.000000e+00 : f32
    %165 = vector.broadcast %cst_44 : f32 to vector<1x128xf32>
    %166 = arith.addf %165, %164 : vector<1x128xf32>
    %167 = arith.divf %165, %166 : vector<1x128xf32>
    %168 = vector.extract_strided_slice %161 {offsets = [0, 128], sizes = [1, 128], strides = [1, 1]} : vector<1x512xf32> to vector<1x128xf32>
    %169 = arith.negf %168 : vector<1x128xf32>
    %170 = math.exp %169 : vector<1x128xf32>
    %cst_45 = arith.constant 1.000000e+00 : f32
    %171 = vector.broadcast %cst_45 : f32 to vector<1x128xf32>
    %172 = arith.addf %171, %170 : vector<1x128xf32>
    %173 = arith.divf %171, %172 : vector<1x128xf32>
    %174 = vector.extract_strided_slice %161 {offsets = [0, 256], sizes = [1, 128], strides = [1, 1]} : vector<1x512xf32> to vector<1x128xf32>
    %175 = math.tanh %174 : vector<1x128xf32>
    %176 = vector.extract_strided_slice %161 {offsets = [0, 384], sizes = [1, 128], strides = [1, 1]} : vector<1x512xf32> to vector<1x128xf32>
    %177 = arith.negf %176 : vector<1x128xf32>
    %178 = math.exp %177 : vector<1x128xf32>
    %cst_46 = arith.constant 1.000000e+00 : f32
    %179 = vector.broadcast %cst_46 : f32 to vector<1x128xf32>
    %180 = arith.addf %179, %178 : vector<1x128xf32>
    %181 = arith.divf %179, %180 : vector<1x128xf32>
    %182 = arith.mulf %173, %152 : vector<1x128xf32>
    %183 = arith.mulf %167, %175 : vector<1x128xf32>
    %184 = arith.addf %182, %183 : vector<1x128xf32>
    %185 = math.tanh %184 : vector<1x128xf32>
    %186 = arith.mulf %181, %185 : vector<1x128xf32>
    %c4_i32_47 = arith.constant 4 : i32
    %187 = arith.addi %5, %c4_i32_47 : i32
    %c8_i32_48 = arith.constant 8 : i32
    %188 = arith.cmpi slt, %187, %c8_i32_48 : i32
    %189 = arith.select %188, %184, %152 : vector<1x128xf32>
    %190 = arith.select %188, %186, %153 : vector<1x128xf32>
    %c5_i32 = arith.constant 5 : i32
    %191 = arith.addi %5, %c5_i32 : i32
    %192 = arith.index_cast %191 : i32 to index
    %193 = memref.load %arg1[%192] : memref<8xi32, #tpu.memory_space<smem>>
    %194 = arith.index_cast %193 : i32 to index
    %c0_49 = arith.constant 0 : index
    %195 = vector.load %arg2[%194, %c0_49] : memref<128x512xf32, #tpu.memory_space<vmem>>, vector<1x512xf32>
    %c0_50 = arith.constant 0 : index
    %c0_51 = arith.constant 0 : index
    %196 = vector.load %arg5[%c0_50, %c0_51] : memref<128x512xf32, #tpu.memory_space<vmem>>, vector<128x512xf32>
    %cst_52 = arith.constant dense<0.000000e+00> : vector<1x512xf32>
    %197 = tpu.matmul %190, %196, %cst_52 {dimension_numbers = #tpu.dot_dimension_numbers<[1], [0], [0], [1], [0, 0, 1, 1], [], []>} : vector<1x128xf32>, vector<128x512xf32>, vector<1x512xf32> -> vector<1x512xf32>
    %198 = arith.addf %197, %195 : vector<1x512xf32>
    %199 = vector.extract_strided_slice %198 {offsets = [0, 0], sizes = [1, 128], strides = [1, 1]} : vector<1x512xf32> to vector<1x128xf32>
    %200 = arith.negf %199 : vector<1x128xf32>
    %201 = math.exp %200 : vector<1x128xf32>
    %cst_53 = arith.constant 1.000000e+00 : f32
    %202 = vector.broadcast %cst_53 : f32 to vector<1x128xf32>
    %203 = arith.addf %202, %201 : vector<1x128xf32>
    %204 = arith.divf %202, %203 : vector<1x128xf32>
    %205 = vector.extract_strided_slice %198 {offsets = [0, 128], sizes = [1, 128], strides = [1, 1]} : vector<1x512xf32> to vector<1x128xf32>
    %206 = arith.negf %205 : vector<1x128xf32>
    %207 = math.exp %206 : vector<1x128xf32>
    %cst_54 = arith.constant 1.000000e+00 : f32
    %208 = vector.broadcast %cst_54 : f32 to vector<1x128xf32>
    %209 = arith.addf %208, %207 : vector<1x128xf32>
    %210 = arith.divf %208, %209 : vector<1x128xf32>
    %211 = vector.extract_strided_slice %198 {offsets = [0, 256], sizes = [1, 128], strides = [1, 1]} : vector<1x512xf32> to vector<1x128xf32>
    %212 = math.tanh %211 : vector<1x128xf32>
    %213 = vector.extract_strided_slice %198 {offsets = [0, 384], sizes = [1, 128], strides = [1, 1]} : vector<1x512xf32> to vector<1x128xf32>
    %214 = arith.negf %213 : vector<1x128xf32>
    %215 = math.exp %214 : vector<1x128xf32>
    %cst_55 = arith.constant 1.000000e+00 : f32
    %216 = vector.broadcast %cst_55 : f32 to vector<1x128xf32>
    %217 = arith.addf %216, %215 : vector<1x128xf32>
    %218 = arith.divf %216, %217 : vector<1x128xf32>
    %219 = arith.mulf %210, %189 : vector<1x128xf32>
    %220 = arith.mulf %204, %212 : vector<1x128xf32>
    %221 = arith.addf %219, %220 : vector<1x128xf32>
    %222 = math.tanh %221 : vector<1x128xf32>
    %223 = arith.mulf %218, %222 : vector<1x128xf32>
    %c5_i32_56 = arith.constant 5 : i32
    %224 = arith.addi %5, %c5_i32_56 : i32
    %c8_i32_57 = arith.constant 8 : i32
    %225 = arith.cmpi slt, %224, %c8_i32_57 : i32
    %226 = arith.select %225, %221, %189 : vector<1x128xf32>
    %227 = arith.select %225, %223, %190 : vector<1x128xf32>
    %c6_i32 = arith.constant 6 : i32
    %228 = arith.addi %5, %c6_i32 : i32
    %229 = arith.index_cast %228 : i32 to index
    %230 = memref.load %arg1[%229] : memref<8xi32, #tpu.memory_space<smem>>
    %231 = arith.index_cast %230 : i32 to index
    %c0_58 = arith.constant 0 : index
    %232 = vector.load %arg2[%231, %c0_58] : memref<128x512xf32, #tpu.memory_space<vmem>>, vector<1x512xf32>
    %c0_59 = arith.constant 0 : index
    %c0_60 = arith.constant 0 : index
    %233 = vector.load %arg5[%c0_59, %c0_60] : memref<128x512xf32, #tpu.memory_space<vmem>>, vector<128x512xf32>
    %cst_61 = arith.constant dense<0.000000e+00> : vector<1x512xf32>
    %234 = tpu.matmul %227, %233, %cst_61 {dimension_numbers = #tpu.dot_dimension_numbers<[1], [0], [0], [1], [0, 0, 1, 1], [], []>} : vector<1x128xf32>, vector<128x512xf32>, vector<1x512xf32> -> vector<1x512xf32>
    %235 = arith.addf %234, %232 : vector<1x512xf32>
    %236 = vector.extract_strided_slice %235 {offsets = [0, 0], sizes = [1, 128], strides = [1, 1]} : vector<1x512xf32> to vector<1x128xf32>
    %237 = arith.negf %236 : vector<1x128xf32>
    %238 = math.exp %237 : vector<1x128xf32>
    %cst_62 = arith.constant 1.000000e+00 : f32
    %239 = vector.broadcast %cst_62 : f32 to vector<1x128xf32>
    %240 = arith.addf %239, %238 : vector<1x128xf32>
    %241 = arith.divf %239, %240 : vector<1x128xf32>
    %242 = vector.extract_strided_slice %235 {offsets = [0, 128], sizes = [1, 128], strides = [1, 1]} : vector<1x512xf32> to vector<1x128xf32>
    %243 = arith.negf %242 : vector<1x128xf32>
    %244 = math.exp %243 : vector<1x128xf32>
    %cst_63 = arith.constant 1.000000e+00 : f32
    %245 = vector.broadcast %cst_63 : f32 to vector<1x128xf32>
    %246 = arith.addf %245, %244 : vector<1x128xf32>
    %247 = arith.divf %245, %246 : vector<1x128xf32>
    %248 = vector.extract_strided_slice %235 {offsets = [0, 256], sizes = [1, 128], strides = [1, 1]} : vector<1x512xf32> to vector<1x128xf32>
    %249 = math.tanh %248 : vector<1x128xf32>
    %250 = vector.extract_strided_slice %235 {offsets = [0, 384], sizes = [1, 128], strides = [1, 1]} : vector<1x512xf32> to vector<1x128xf32>
    %251 = arith.negf %250 : vector<1x128xf32>
    %252 = math.exp %251 : vector<1x128xf32>
    %cst_64 = arith.constant 1.000000e+00 : f32
    %253 = vector.broadcast %cst_64 : f32 to vector<1x128xf32>
    %254 = arith.addf %253, %252 : vector<1x128xf32>
    %255 = arith.divf %253, %254 : vector<1x128xf32>
    %256 = arith.mulf %247, %226 : vector<1x128xf32>
    %257 = arith.mulf %241, %249 : vector<1x128xf32>
    %258 = arith.addf %256, %257 : vector<1x128xf32>
    %259 = math.tanh %258 : vector<1x128xf32>
    %260 = arith.mulf %255, %259 : vector<1x128xf32>
    %c6_i32_65 = arith.constant 6 : i32
    %261 = arith.addi %5, %c6_i32_65 : i32
    %c8_i32_66 = arith.constant 8 : i32
    %262 = arith.cmpi slt, %261, %c8_i32_66 : i32
    %263 = arith.select %262, %258, %226 : vector<1x128xf32>
    %264 = arith.select %262, %260, %227 : vector<1x128xf32>
    %c7_i32 = arith.constant 7 : i32
    %265 = arith.addi %5, %c7_i32 : i32
    %266 = arith.index_cast %265 : i32 to index
    %267 = memref.load %arg1[%266] : memref<8xi32, #tpu.memory_space<smem>>
    %268 = arith.index_cast %267 : i32 to index
    %c0_67 = arith.constant 0 : index
    %269 = vector.load %arg2[%268, %c0_67] : memref<128x512xf32, #tpu.memory_space<vmem>>, vector<1x512xf32>
    %c0_68 = arith.constant 0 : index
    %c0_69 = arith.constant 0 : index
    %270 = vector.load %arg5[%c0_68, %c0_69] : memref<128x512xf32, #tpu.memory_space<vmem>>, vector<128x512xf32>
    %cst_70 = arith.constant dense<0.000000e+00> : vector<1x512xf32>
    %271 = tpu.matmul %264, %270, %cst_70 {dimension_numbers = #tpu.dot_dimension_numbers<[1], [0], [0], [1], [0, 0, 1, 1], [], []>} : vector<1x128xf32>, vector<128x512xf32>, vector<1x512xf32> -> vector<1x512xf32>
    %272 = arith.addf %271, %269 : vector<1x512xf32>
    %273 = vector.extract_strided_slice %272 {offsets = [0, 0], sizes = [1, 128], strides = [1, 1]} : vector<1x512xf32> to vector<1x128xf32>
    %274 = arith.negf %273 : vector<1x128xf32>
    %275 = math.exp %274 : vector<1x128xf32>
    %cst_71 = arith.constant 1.000000e+00 : f32
    %276 = vector.broadcast %cst_71 : f32 to vector<1x128xf32>
    %277 = arith.addf %276, %275 : vector<1x128xf32>
    %278 = arith.divf %276, %277 : vector<1x128xf32>
    %279 = vector.extract_strided_slice %272 {offsets = [0, 128], sizes = [1, 128], strides = [1, 1]} : vector<1x512xf32> to vector<1x128xf32>
    %280 = arith.negf %279 : vector<1x128xf32>
    %281 = math.exp %280 : vector<1x128xf32>
    %cst_72 = arith.constant 1.000000e+00 : f32
    %282 = vector.broadcast %cst_72 : f32 to vector<1x128xf32>
    %283 = arith.addf %282, %281 : vector<1x128xf32>
    %284 = arith.divf %282, %283 : vector<1x128xf32>
    %285 = vector.extract_strided_slice %272 {offsets = [0, 256], sizes = [1, 128], strides = [1, 1]} : vector<1x512xf32> to vector<1x128xf32>
    %286 = math.tanh %285 : vector<1x128xf32>
    %287 = vector.extract_strided_slice %272 {offsets = [0, 384], sizes = [1, 128], strides = [1, 1]} : vector<1x512xf32> to vector<1x128xf32>
    %288 = arith.negf %287 : vector<1x128xf32>
    %289 = math.exp %288 : vector<1x128xf32>
    %cst_73 = arith.constant 1.000000e+00 : f32
    %290 = vector.broadcast %cst_73 : f32 to vector<1x128xf32>
    %291 = arith.addf %290, %289 : vector<1x128xf32>
    %292 = arith.divf %290, %291 : vector<1x128xf32>
    %293 = arith.mulf %284, %263 : vector<1x128xf32>
    %294 = arith.mulf %278, %286 : vector<1x128xf32>
    %295 = arith.addf %293, %294 : vector<1x128xf32>
    %296 = math.tanh %295 : vector<1x128xf32>
    %297 = arith.mulf %292, %296 : vector<1x128xf32>
    %c7_i32_74 = arith.constant 7 : i32
    %298 = arith.addi %5, %c7_i32_74 : i32
    %c8_i32_75 = arith.constant 8 : i32
    %299 = arith.cmpi slt, %298, %c8_i32_75 : i32
    %300 = arith.select %299, %295, %263 : vector<1x128xf32>
    %301 = arith.select %299, %297, %264 : vector<1x128xf32>
    %c0_76 = arith.constant 0 : index
    %c0_77 = arith.constant 0 : index
    %302 = vector.load %arg9[%c0_76, %c0_77] : memref<1x128xf32, #tpu.memory_space<vmem>>, vector<1x128xf32>
    tpu.vector_store %arg9[%c0_76, %c0_77], %301 {strides = array<i32>} : memref<1x128xf32, #tpu.memory_space<vmem>>, vector<1x128xf32>,
    %c0_78 = arith.constant 0 : index
    %c0_79 = arith.constant 0 : index
    %303 = vector.load %arg10[%c0_78, %c0_79] : memref<1x128xf32, #tpu.memory_space<vmem>>, vector<1x128xf32>
    tpu.vector_store %arg10[%c0_78, %c0_79], %300 {strides = array<i32>} : memref<1x128xf32, #tpu.memory_space<vmem>>, vector<1x128xf32>,
    %304 = tpu.concatenate %42, %79, %116, %153, %190, %227, %264, %301 in 0 : vector<1x128xf32>, vector<1x128xf32>, vector<1x128xf32>, vector<1x128xf32>, vector<1x128xf32>, vector<1x128xf32>, vector<1x128xf32>, vector<1x128xf32> -> vector<8x128xf32>
    %c0_80 = arith.constant 0 : index
    %c0_81 = arith.constant 0 : index
    %305 = vector.load %arg6[%c0_80, %c0_81] : memref<128x128xf32, #tpu.memory_space<vmem>>, vector<128x128xf32>
    %cst_82 = arith.constant dense<0.000000e+00> : vector<8x128xf32>
    %306 = tpu.matmul %304, %305, %cst_82 {dimension_numbers = #tpu.dot_dimension_numbers<[1], [0], [0], [1], [0, 0, 1, 1], [], []>} : vector<8x128xf32>, vector<128x128xf32>, vector<8x128xf32> -> vector<8x128xf32>
    %c0_83 = arith.constant 0 : index
    %c0_84 = arith.constant 0 : index
    %307 = vector.load %arg7[%c0_83, %c0_84] : memref<1x128xf32, #tpu.memory_space<vmem>>, vector<1x128xf32>
    %308 = vector.broadcast %307 : vector<1x128xf32> to vector<8x128xf32>
    %309 = arith.addf %306, %308 : vector<8x128xf32>
    %c0_85 = arith.constant 0 : index
    %c0_86 = arith.constant 0 : index
    %310 = vector.load %arg8[%c0_85, %c0_86] : memref<8x128xf32, #tpu.memory_space<vmem>>, vector<8x128xf32>
    tpu.vector_store %arg8[%c0_85, %c0_86], %309 {strides = array<i32>} : memref<8x128xf32, #tpu.memory_space<vmem>>, vector<8x128xf32>,
    return
  }
  func.func @transform_0(%arg0: i32, %arg1: memref<8xi32, #tpu.memory_space<smem>>) -> (i32, i32) {
    %c0_i32 = arith.constant 0 : i32
    %c0_i32_0 = arith.constant 0 : i32
    %c0_i32_1 = arith.constant 0 : i32
    return %c0_i32, %c0_i32_0 : i32, i32
  }
  func.func @transform_1(%arg0: i32, %arg1: memref<8xi32, #tpu.memory_space<smem>>) -> (i32, i32) {
    %c0_i32 = arith.constant 0 : i32
    %c0_i32_0 = arith.constant 0 : i32
    %c0_i32_1 = arith.constant 0 : i32
    return %c0_i32, %c0_i32_0 : i32, i32
  }
  func.func @transform_2(%arg0: i32, %arg1: memref<8xi32, #tpu.memory_space<smem>>) -> (i32, i32) {
    %c0_i32 = arith.constant 0 : i32
    %c0_i32_0 = arith.constant 0 : i32
    %c0_i32_1 = arith.constant 0 : i32
    return %c0_i32, %c0_i32_0 : i32, i32
  }
  func.func @transform_3(%arg0: i32, %arg1: memref<8xi32, #tpu.memory_space<smem>>) -> (i32, i32) {
    %c0_i32 = arith.constant 0 : i32
    %c0_i32_0 = arith.constant 0 : i32
    %c0_i32_1 = arith.constant 0 : i32
    return %c0_i32, %c0_i32_0 : i32, i32
  }
  func.func @transform_4(%arg0: i32, %arg1: memref<8xi32, #tpu.memory_space<smem>>) -> (i32, i32) {
    %c0_i32 = arith.constant 0 : i32
    %c0_i32_0 = arith.constant 0 : i32
    %c0_i32_1 = arith.constant 0 : i32
    return %c0_i32, %c0_i32_0 : i32, i32
  }
  func.func @transform_5(%arg0: i32, %arg1: memref<8xi32, #tpu.memory_space<smem>>) -> (i32, i32) {
    %c0_i32 = arith.constant 0 : i32
    %c0_i32_0 = arith.constant 0 : i32
    %c0_i32_1 = arith.constant 0 : i32
    return %c0_i32, %c0_i32_0 : i32, i32
  }
  func.func @transform_6(%arg0: i32, %arg1: memref<8xi32, #tpu.memory_space<smem>>) -> (i32, i32) {
    %c0_i32 = arith.constant 0 : i32
    %c0_i32_0 = arith.constant 0 : i32
    return %arg0, %c0_i32 : i32, i32
  }
  func.func @transform_7(%arg0: i32, %arg1: memref<8xi32, #tpu.memory_space<smem>>) -> (i32, i32) {
    %c0_i32 = arith.constant 0 : i32
    %c0_i32_0 = arith.constant 0 : i32
    %c0_i32_1 = arith.constant 0 : i32
    return %c0_i32, %c0_i32_0 : i32, i32
  }
  func.func @transform_8(%arg0: i32, %arg1: memref<8xi32, #tpu.memory_space<smem>>) -> (i32, i32) {
    %c0_i32 = arith.constant 0 : i32
    %c0_i32_0 = arith.constant 0 : i32
    %c0_i32_1 = arith.constant 0 : i32
    return %c0_i32, %c0_i32_0 : i32, i32
  }
}

</mosaic_0001>

<llo_original>
// kernel: tpu_custom_call.1
$region0: #{tpu_custom_call.1}
  #allocation0 [shape = 'u32[]', space=smem, size = 0x4, offset = 0x4, fixed_abs, tag = 'smem constant byte address 0x4 - core index']
  #allocation1 [shape = 'u32[144,128]{1,0:T(1,128)}', space=vmem, size = 0x12000, scoped, tag = 'internal scratch']
  #allocation2 [shape = 's32[1]{0}', space=sflag, size = 0x4, scoped, tag = 'scoped memory for tpu_custom_call.1']
  #allocation3 [shape = 'u8[512]{0}', space=smem, size = 0x200, scoped, tag = 'prefetched SMEM operand 0']
  %s0 = inlined_call_operand.hbm [shape: s32[8], index: 0, kind: input, shape index: {}]
  %s1 = inlined_call_operand.hbm [shape: f32[128,512], index: 1, kind: input, shape index: {}]
  %s2 = inlined_call_operand.vmem [shape: f32[1,128], index: 2, kind: input, shape index: {}]
  %s3 = inlined_call_operand.vmem [shape: f32[1,128], index: 3, kind: input, shape index: {}]
  %s4 = inlined_call_operand.hbm [shape: f32[128,512], index: 4, kind: input, shape index: {}]
  %s5 = inlined_call_operand.hbm [shape: f32[128,128], index: 5, kind: input, shape index: {}]
  %s6 = inlined_call_operand.vmem [shape: f32[1,128], index: 6, kind: input, shape index: {}]
  %s7 = inlined_call_operand.hbm [shape: f32[8,128], index: 7, kind: output, shape index: {0}]
  %s8 = inlined_call_operand.hbm [shape: f32[1,128], index: 8, kind: output, shape index: {1}]
  %s9 = inlined_call_operand.hbm [shape: f32[1,128], index: 9, kind: output, shape index: {2}]
  %10 = xla_tuple %s7, %s8, %s9
  %s11 = sld [smem:[#allocation0]]
  $region66: #{tpu_custom_call.1} parent=0
    _
  %s13 = ssub.s32 1, %s11
  %s14 = scalar_select 0, %s13, %s11
  %16 = dma.hbm_to_smem %s0, 16, [#allocation3], [#allocation2]
  %17 = dma.done [#allocation2], 16
  %18 = sfence
  $region1: #{tpu_custom_call.1} parent=0
    #allocation4 [shape = 'u8[262144]{0}', space=vmem, size = 0x40000, scoped, tag = 'input window, operand 1, single buffered']
    #allocation5 [shape = 's32[1]{0}', space=sflag, size = 0x4, scoped, tag = 'scoped memory for tpu_custom_call.1']
    #allocation6 [shape = 's32[1]{0}', space=sflag, size = 0x4, scoped, tag = 'scoped memory for tpu_custom_call.1']
    #allocation7 [shape = 'u8[262144]{0}', space=vmem, size = 0x40000, scoped, tag = 'input window, operand 4, single buffered']
    #allocation8 [shape = 's32[1]{0}', space=sflag, size = 0x4, scoped, tag = 'scoped memory for tpu_custom_call.1']
    #allocation9 [shape = 'u8[65536]{0}', space=vmem, size = 0x10000, scoped, tag = 'input window, operand 5, single buffered']
    #allocation10 [shape = 'u8[4096]{0}', space=vmem, size = 0x1000, scoped, tag = 'output window, operand 0, single buffered']
    #allocation11 [shape = 'u8[512]{0}', space=vmem, size = 0x400, scoped, tag = 'output window, operand 1, single buffered']
    #allocation12 [shape = 's32[1]{0}', space=sflag, size = 0x4, scoped, tag = 'scoped memory for tpu_custom_call.1']
    #allocation13 [shape = 'u8[512]{0}', space=vmem, size = 0x400, scoped, tag = 'output window, operand 2, single buffered']
    %19 = vsyncpa [#allocation5], 0
    %20 = vsyncpa [#allocation8], 0
    %21 = vsyncpa [#allocation6], 0
    %22 = vsyncpa [#allocation12], 0
    // Predicated region
    $region2: #{tpu_custom_call.1} parent=1 // pred_check
      _
    $region3: #{tpu_custom_call.1} parent=1 // pred_check_branch
      %24 = sbr.rel (0) target = $region5
    $region4: #{tpu_custom_call.1} parent=1 // pred_region
      %s26 = ssub.s32 8192, 8192
      %27 = vsyncadd [#allocation5], %s26
      %s28 = sshll.u32 [#allocation4], 4
      %s29 = int_to_ptr.vmem [resolvable:$true] %s28
      %34 = dma.hbm_to_vmem [thread:$0]  %s1, 8192, %s29, [#allocation5], 512, 512, 32
    $region5: #{tpu_custom_call.1} parent=1 // pred_fallthru
      _
    // Predicated region
    $region6: #{tpu_custom_call.1} parent=1 // pred_check
      _
    $region7: #{tpu_custom_call.1} parent=1 // pred_check_branch
      %36 = sbr.rel (0) target = $region9
    $region8: #{tpu_custom_call.1} parent=1 // pred_region
      _
    $region9: #{tpu_custom_call.1} parent=1 // pred_fallthru
      _
    // Predicated region
    $region10: #{tpu_custom_call.1} parent=1 // pred_check
      _
    $region11: #{tpu_custom_call.1} parent=1 // pred_check_branch
      %38 = sbr.rel (0) target = $region13
    $region12: #{tpu_custom_call.1} parent=1 // pred_region
      _
    $region13: #{tpu_custom_call.1} parent=1 // pred_fallthru
      _
    // Predicated region
    $region14: #{tpu_custom_call.1} parent=1 // pred_check
      _
    $region15: #{tpu_custom_call.1} parent=1 // pred_check_branch
      %40 = sbr.rel (0) target = $region17
    $region16: #{tpu_custom_call.1} parent=1 // pred_region
      %s42 = ssub.s32 8192, 8192
      %43 = vsyncadd [#allocation8], %s42
      %s44 = sshll.u32 [#allocation7], 4
      %s45 = int_to_ptr.vmem [resolvable:$true] %s44
      %50 = dma.hbm_to_vmem [thread:$0]  %s4, 8192, %s45, [#allocation8], 512, 512, 32
    $region17: #{tpu_custom_call.1} parent=1 // pred_fallthru
      _
    // Predicated region
    $region18: #{tpu_custom_call.1} parent=1 // pred_check
      _
    $region19: #{tpu_custom_call.1} parent=1 // pred_check_branch
      %52 = sbr.rel (0) target = $region21
    $region20: #{tpu_custom_call.1} parent=1 // pred_region
      %s54 = ssub.s32 2048, 2048
      %55 = vsyncadd [#allocation8], %s54
      %s56 = sshll.u32 [#allocation9], 4
      %s57 = int_to_ptr.vmem [resolvable:$true] %s56
      %62 = dma.hbm_to_vmem [thread:$0]  %s5, 2048, %s57, [#allocation8], 128, 128, 8
    $region21: #{tpu_custom_call.1} parent=1 // pred_fallthru
      _
    // Predicated region
    $region22: #{tpu_custom_call.1} parent=1 // pred_check
      _
    $region23: #{tpu_custom_call.1} parent=1 // pred_check_branch
      %64 = sbr.rel (0) target = $region25
    $region24: #{tpu_custom_call.1} parent=1 // pred_region
      _
    $region25: #{tpu_custom_call.1} parent=1 // pred_fallthru
      _
    // Predicated region
    $region26: #{tpu_custom_call.1} parent=1 // pred_check
      _
    $region27: #{tpu_custom_call.1} parent=1 // pred_check_branch
      %66 = sbr.rel (0) target = $region29
    $region28: #{tpu_custom_call.1} parent=1 // pred_region
      %67 = dma.done [#allocation5], 8192
    $region29: #{tpu_custom_call.1} parent=1 // pred_fallthru
      _
    // Predicated region
    $region30: #{tpu_custom_call.1} parent=1 // pred_check
      _
    $region31: #{tpu_custom_call.1} parent=1 // pred_check_branch
      %69 = sbr.rel (0) target = $region33
    $region32: #{tpu_custom_call.1} parent=1 // pred_region
      %70 = dma.done [#allocation8], 8192
    $region33: #{tpu_custom_call.1} parent=1 // pred_fallthru
      _
    // Predicated region
    $region34: #{tpu_custom_call.1} parent=1 // pred_check
      _
    $region35: #{tpu_custom_call.1} parent=1 // pred_check_branch
      %72 = sbr.rel (0) target = $region37
    $region36: #{tpu_custom_call.1} parent=1 // pred_region
      %73 = dma.done [#allocation8], 2048
    $region37: #{tpu_custom_call.1} parent=1 // pred_fallthru
      _
    %p74 = scmp.eq.s32.totalorder 0, 0
    // Predicated region
    $region38: #{tpu_custom_call.1} parent=1 // pred_check
      %p75 = pneg %p74
    $region39: #{tpu_custom_call.1} parent=1 // pred_check_branch
      %77 = sbr.rel (%p75) target = $region41
    $region40: #{tpu_custom_call.1} parent=1 // pred_region
      %v78 = vld [vmem:[%s2] sm:$0x1]
      %79 = vst [vmem:[#allocation11] sm:$0x1] %v78
      %v80 = vld [vmem:[%s3] sm:$0x1]
      %81 = vst [vmem:[#allocation13] sm:$0x1] %v80
    $region41: #{tpu_custom_call.1} parent=1 // pred_fallthru
      _
    %v82 = vld [vmem:[#allocation11] sm:$0x1]
    %v83 = vld [vmem:[#allocation13] sm:$0x1]
    %s84 = smul.u32 0, 8
    %s85 = sld [smem:[#allocation3 + %s84]]
    %s86 = sshra.s32 %s85, 3
    %s87 = sand.u32 %s85, 7
    %s88 = sshra.s32 %s85, 3
    %s89 = sand.u32 %s85, 7
    %s90 = smul.u32 %s86, 4
    %s91 = smul.u32 %s90, 8
    %s92 = sadd.s32 %s91, %s89
    %s93 = scalar_lea.vmem [#allocation4], %s92
    %v94 = vld [vmem:[%s93] ss:$8 sm:$0xf]
    %v95 = vld [vmem:[#allocation7] sm:$0xff]
    %v96 = vld [vmem:[#allocation7 + $0x8] sm:$0xff]
    %v97 = vld [vmem:[#allocation7 + $0x10] sm:$0xff]
    %v98 = vld [vmem:[#allocation7 + $0x18] sm:$0xff]
    %v99 = vld [vmem:[#allocation7 + $0x20] sm:$0xff]
    %v100 = vld [vmem:[#allocation7 + $0x28] sm:$0xff]
    %v101 = vld [vmem:[#allocation7 + $0x30] sm:$0xff]
    %v102 = vld [vmem:[#allocation7 + $0x38] sm:$0xff]
    %v103 = vld [vmem:[#allocation7 + $0x40] sm:$0xff]
    %v104 = vld [vmem:[#allocation7 + $0x48] sm:$0xff]
    %v105 = vld [vmem:[#allocation7 + $0x50] sm:$0xff]
    %v106 = vld [vmem:[#allocation7 + $0x58] sm:$0xff]
    %v107 = vld [vmem:[#allocation7 + $0x60] sm:$0xff]
    %v108 = vld [vmem:[#allocation7 + $0x68] sm:$0xff]
    %v109 = vld [vmem:[#allocation7 + $0x70] sm:$0xff]
    %v110 = vld [vmem:[#allocation7 + $0x78] sm:$0xff]
    %v111 = vld [vmem:[#allocation7 + $0x80] sm:$0xff]
    %v112 = vld [vmem:[#allocation7 + $0x88] sm:$0xff]
    %v113 = vld [vmem:[#allocation7 + $0x90] sm:$0xff]
    %v114 = vld [vmem:[#allocation7 + $0x98] sm:$0xff]
    %v115 = vld [vmem:[#allocation7 + $0xa0] sm:$0xff]
    %v116 = vld [vmem:[#allocation7 + $0xa8] sm:$0xff]
    %v117 = vld [vmem:[#allocation7 + $0xb0] sm:$0xff]
    %v118 = vld [vmem:[#allocation7 + $0xb8] sm:$0xff]
    %v119 = vld [vmem:[#allocation7 + $0xc0] sm:$0xff]
    %v120 = vld [vmem:[#allocation7 + $0xc8] sm:$0xff]
    %v121 = vld [vmem:[#allocation7 + $0xd0] sm:$0xff]
    %v122 = vld [vmem:[#allocation7 + $0xd8] sm:$0xff]
    %v123 = vld [vmem:[#allocation7 + $0xe0] sm:$0xff]
    %v124 = vld [vmem:[#allocation7 + $0xe8] sm:$0xff]
    %v125 = vld [vmem:[#allocation7 + $0xf0] sm:$0xff]
    %v126 = vld [vmem:[#allocation7 + $0xf8] sm:$0xff]
    %v127 = vld [vmem:[#allocation7 + $0x100] sm:$0xff]
    %v128 = vld [vmem:[#allocation7 + $0x108] sm:$0xff]
    %v129 = vld [vmem:[#allocation7 + $0x110] sm:$0xff]
    %v130 = vld [vmem:[#allocation7 + $0x118] sm:$0xff]
    %v131 = vld [vmem:[#allocation7 + $0x120] sm:$0xff]
    %v132 = vld [vmem:[#allocation7 + $0x128] sm:$0xff]
    %v133 = vld [vmem:[#allocation7 + $0x130] sm:$0xff]
    %v134 = vld [vmem:[#allocation7 + $0x138] sm:$0xff]
    %v135 = vld [vmem:[#allocation7 + $0x140] sm:$0xff]
    %v136 = vld [vmem:[#allocation7 + $0x148] sm:$0xff]
    %v137 = vld [vmem:[#allocation7 + $0x150] sm:$0xff]
    %v138 = vld [vmem:[#allocation7 + $0x158] sm:$0xff]
    %v139 = vld [vmem:[#allocation7 + $0x160] sm:$0xff]
    %v140 = vld [vmem:[#allocation7 + $0x168] sm:$0xff]
    %v141 = vld [vmem:[#allocation7 + $0x170] sm:$0xff]
    %v142 = vld [vmem:[#allocation7 + $0x178] sm:$0xff]
    %v143 = vld [vmem:[#allocation7 + $0x180] sm:$0xff]
    %v144 = vld [vmem:[#allocation7 + $0x188] sm:$0xff]
    %v145 = vld [vmem:[#allocation7 + $0x190] sm:$0xff]
    %v146 = vld [vmem:[#allocation7 + $0x198] sm:$0xff]
    %v147 = vld [vmem:[#allocation7 + $0x1a0] sm:$0xff]
    %v148 = vld [vmem:[#allocation7 + $0x1a8] sm:$0xff]
    %v149 = vld [vmem:[#allocation7 + $0x1b0] sm:$0xff]
    %v150 = vld [vmem:[#allocation7 + $0x1b8] sm:$0xff]
    %v151 = vld [vmem:[#allocation7 + $0x1c0] sm:$0xff]
    %v152 = vld [vmem:[#allocation7 + $0x1c8] sm:$0xff]
    %v153 = vld [vmem:[#allocation7 + $0x1d0] sm:$0xff]
    %v154 = vld [vmem:[#allocation7 + $0x1d8] sm:$0xff]
    %v155 = vld [vmem:[#allocation7 + $0x1e0] sm:$0xff]
    %v156 = vld [vmem:[#allocation7 + $0x1e8] sm:$0xff]
    %v157 = vld [vmem:[#allocation7 + $0x1f0] sm:$0xff]
    %v158 = vld [vmem:[#allocation7 + $0x1f8] sm:$0xff]
    %v160 = vlaneseq
    %v161 = vshrl.u32 %v160, 7
    %v162 = vsub.s32 0, %v161
    %v163 = vrot.slane %v94, %v162
    %v164 = vlaneseq
    %v165 = vshrl.u32 %v164, 7
    %v166 = vsub.s32 1, %v165
    %v167 = vrot.slane %v94, %v166
    %v168 = vlaneseq
    %v169 = vshrl.u32 %v168, 7
    %v170 = vsub.s32 2, %v169
    %v171 = vrot.slane %v94, %v170
    %v172 = vlaneseq
    %v173 = vshrl.u32 %v172, 7
    %v174 = vsub.s32 3, %v173
    %v175 = vrot.slane %v94, %v174
    %180 = vmatprep.subr.mxu0 %v96
    %181 = vmatpush1.msra.mxu0 %v95
    %182 = vmatprep.subr.mxu0 %v100
    %183 = vmatpush1.msra.mxu0 %v99
    %184 = vmatprep.subr.mxu0 %v104
    %185 = vmatpush1.msra.mxu0 %v103
    %186 = vmatprep.subr.mxu0 %v108
    %187 = vmatpush1.msra.mxu0 %v107
    %188 = vmatprep.subr.mxu0 %v112
    %189 = vmatpush1.msra.mxu0 %v111
    %190 = vmatprep.subr.mxu0 %v116
    %191 = vmatpush1.msra.mxu0 %v115
    %192 = vmatprep.subr.mxu0 %v120
    %193 = vmatpush1.msra.mxu0 %v119
    %194 = vmatprep.subr.mxu0 %v124
    %195 = vmatpush1.msra.mxu0 %v123
    %196 = vmatprep.subr.mxu0 %v128
    %197 = vmatpush1.msra.mxu0 %v127
    %198 = vmatprep.subr.mxu0 %v132
    %199 = vmatpush1.msra.mxu0 %v131
    %200 = vmatprep.subr.mxu0 %v136
    %201 = vmatpush1.msra.mxu0 %v135
    %202 = vmatprep.subr.mxu0 %v140
    %203 = vmatpush1.msra.mxu0 %v139
    %204 = vmatprep.subr.mxu0 %v144
    %205 = vmatpush1.msra.mxu0 %v143
    %206 = vmatprep.subr.mxu0 %v148
    %207 = vmatpush1.msra.mxu0 %v147
    %208 = vmatprep.subr.mxu0 %v152
    %209 = vmatpush1.msra.mxu0 %v151
    %210 = vmatprep.subr.mxu0 %v156
    %211 = vmatpush1.msra.mxu0 %v155
    %212 = vmatprep.subr.mxu0 0.0
    %213 = vmatpush1.msra.mxu0 0.0
    %214 = vmatprep.subr.mxu0 0.0
    %215 = vmatpush1.msra.mxu0 0.0
    %216 = vmatprep.subr.mxu0 0.0
    %217 = vmatpush1.msra.mxu0 0.0
    %218 = vmatprep.subr.mxu0 0.0
    %219 = vmatpush1.msra.mxu0 0.0
    %220 = vmatprep.subr.mxu0 0.0
    %221 = vmatpush1.msra.mxu0 0.0
    %222 = vmatprep.subr.mxu0 0.0
    %223 = vmatpush1.msra.mxu0 0.0
    %224 = vmatprep.subr.mxu0 0.0
    %225 = vmatpush1.msra.mxu0 0.0
    %226 = vmatprep.subr.mxu0 0.0
    %227 = vmatpush1.msra.mxu0 0.0
    %228 = vmatprep.subr.mxu0 0.0
    %229 = vmatpush1.msra.mxu0 0.0
    %230 = vmatprep.subr.mxu0 0.0
    %231 = vmatpush1.msra.mxu0 0.0
    %232 = vmatprep.subr.mxu0 0.0
    %233 = vmatpush1.msra.mxu0 0.0
    %234 = vmatprep.subr.mxu0 0.0
    %235 = vmatpush1.msra.mxu0 0.0
    %236 = vmatprep.subr.mxu0 0.0
    %237 = vmatpush1.msra.mxu0 0.0
    %238 = vmatprep.subr.mxu0 0.0
    %239 = vmatpush1.msra.mxu0 0.0
    %240 = vmatprep.subr.mxu0 0.0
    %241 = vmatpush1.msra.mxu0 0.0
    %242 = vmatprep.subr.mxu0 0.0
    %243 = vmatpush1.msra.mxu0 0.0
    %244 = vmatprep.mubr.f32.mxu0 0.0
    %245 = vmatmul.mubr.f32.gmra.mrb[0].mxu0 %v82
    %v246 = vpop.f32.mrb[0].mxu0
    %v247 = vadd.f32 %v163, %v246
    %v248 = vpop.f32.mrb[0].mxu0
    %v249 = vadd.f32 %v167, %v248
    %250 = vdwg.mxu0
    %251 = vmatprep.subr.mxu0 %v98
    %252 = vmatpush1.msra.mxu0 %v97
    %253 = vmatprep.subr.mxu0 %v102
    %254 = vmatpush1.msra.mxu0 %v101
    %255 = vmatprep.subr.mxu0 %v106
    %256 = vmatpush1.msra.mxu0 %v105
    %257 = vmatprep.subr.mxu0 %v110
    %258 = vmatpush1.msra.mxu0 %v109
    %259 = vmatprep.subr.mxu0 %v114
    %260 = vmatpush1.msra.mxu0 %v113
    %261 = vmatprep.subr.mxu0 %v118
    %262 = vmatpush1.msra.mxu0 %v117
    %263 = vmatprep.subr.mxu0 %v122
    %264 = vmatpush1.msra.mxu0 %v121
    %265 = vmatprep.subr.mxu0 %v126
    %266 = vmatpush1.msra.mxu0 %v125
    %267 = vmatprep.subr.mxu0 %v130
    %268 = vmatpush1.msra.mxu0 %v129
    %269 = vmatprep.subr.mxu0 %v134
    %270 = vmatpush1.msra.mxu0 %v133
    %271 = vmatprep.subr.mxu0 %v138
    %272 = vmatpush1.msra.mxu0 %v137
    %273 = vmatprep.subr.mxu0 %v142
    %274 = vmatpush1.msra.mxu0 %v141
    %275 = vmatprep.subr.mxu0 %v146
    %276 = vmatpush1.msra.mxu0 %v145
    %277 = vmatprep.subr.mxu0 %v150
    %278 = vmatpush1.msra.mxu0 %v149
    %279 = vmatprep.subr.mxu0 %v154
    %280 = vmatpush1.msra.mxu0 %v153
    %281 = vmatprep.subr.mxu0 %v158
    %282 = vmatpush1.msra.mxu0 %v157
    %283 = vmatprep.subr.mxu0 0.0
    %284 = vmatpush1.msra.mxu0 0.0
    %285 = vmatprep.subr.mxu0 0.0
    %286 = vmatpush1.msra.mxu0 0.0
    %287 = vmatprep.subr.mxu0 0.0
    %288 = vmatpush1.msra.mxu0 0.0
    %289 = vmatprep.subr.mxu0 0.0
    %290 = vmatpush1.msra.mxu0 0.0
    %291 = vmatprep.subr.mxu0 0.0
    %292 = vmatpush1.msra.mxu0 0.0
    %293 = vmatprep.subr.mxu0 0.0
    %294 = vmatpush1.msra.mxu0 0.0
    %295 = vmatprep.subr.mxu0 0.0
    %296 = vmatpush1.msra.mxu0 0.0
    %297 = vmatprep.subr.mxu0 0.0
    %298 = vmatpush1.msra.mxu0 0.0
    %299 = vmatprep.subr.mxu0 0.0
    %300 = vmatpush1.msra.mxu0 0.0
    %301 = vmatprep.subr.mxu0 0.0
    %302 = vmatpush1.msra.mxu0 0.0
    %303 = vmatprep.subr.mxu0 0.0
    %304 = vmatpush1.msra.mxu0 0.0
    %305 = vmatprep.subr.mxu0 0.0
    %306 = vmatpush1.msra.mxu0 0.0
    %307 = vmatprep.subr.mxu0 0.0
    %308 = vmatpush1.msra.mxu0 0.0
    %309 = vmatprep.subr.mxu0 0.0
    %310 = vmatpush1.msra.mxu0 0.0
    %311 = vmatprep.subr.mxu0 0.0
    %312 = vmatpush1.msra.mxu0 0.0
    %313 = vmatprep.subr.mxu0 0.0
    %314 = vmatpush1.msra.mxu0 0.0
    %315 = vmatprep.mubr.f32.mxu0 0.0
    %316 = vmatmul.mubr.f32.gmra.mrb[0].mxu0 %v82
    %v317 = vpop.f32.mrb[0].mxu0
    %v318 = vadd.f32 %v171, %v317
    %v319 = vpop.f32.mrb[0].mxu0
    %v320 = vadd.f32 %v175, %v319
    %321 = vdwg.mxu0
    %v322 = vxor.u32 %v247, 2147483648
    %v323 = vmul.f32 %v322, 1.442695
    %v324 = vpow.pop %v323
    %v325 = vadd.f32 %v324, 1.0
    %v326 = vrcp.pop %v325
    %v327 = vmul.f32 1.0, %v326
    %v328 = vxor.u32 %v249, 2147483648
    %v329 = vmul.f32 %v328, 1.442695
    %v330 = vpow.pop %v329
    %v331 = vadd.f32 %v330, 1.0
    %v332 = vrcp.pop %v331
    %v333 = vmul.f32 1.0, %v332
    %v334 = vtanh.pop %v318
    %v335 = vxor.u32 %v320, 2147483648
    %v336 = vmul.f32 %v335, 1.442695
    %v337 = vpow.pop %v336
    %v338 = vadd.f32 %v337, 1.0
    %v339 = vrcp.pop %v338
    %v340 = vmul.f32 1.0, %v339
    %v341 = vmul.f32 %v333, %v83
    %v342 = vmul.f32 %v327, %v334
    %v343 = vadd.f32 %v341, %v342
    %v344 = vtanh.pop %v343
    %v345 = vmul.f32 %v340, %v344
    %p346 = scmp.lt.s32.totalorder %s84, 8
    %s347 = scalar_select %p346, 1, 0
    %v348 = vstv %s347
    %vm349 = vcmp.eq.s32.totalorder %v348, 1
    %v350 = vsel %vm349, %v343, %v83
    %v351 = vsel %vm349, %v345, %v82
    %s352 = sadd.s32 %s84, 1
    %s353 = sld [smem:[#allocation3 + %s352]]
    %s354 = sshra.s32 %s353, 3
    %s355 = sand.u32 %s353, 7
    %s356 = sshra.s32 %s353, 3
    %s357 = sand.u32 %s353, 7
    %s358 = smul.u32 %s354, 4
    %s359 = smul.u32 %s358, 8
    %s360 = sadd.s32 %s359, %s357
    %s361 = scalar_lea.vmem [#allocation4], %s360
    %v362 = vld [vmem:[%s361] ss:$8 sm:$0xf]
    %v364 = vlaneseq
    %v365 = vshrl.u32 %v364, 7
    %v366 = vsub.s32 0, %v365
    %v367 = vrot.slane %v362, %v366
    %v368 = vlaneseq
    %v369 = vshrl.u32 %v368, 7
    %v370 = vsub.s32 1, %v369
    %v371 = vrot.slane %v362, %v370
    %v372 = vlaneseq
    %v373 = vshrl.u32 %v372, 7
    %v374 = vsub.s32 2, %v373
    %v375 = vrot.slane %v362, %v374
    %v376 = vlaneseq
    %v377 = vshrl.u32 %v376, 7
    %v378 = vsub.s32 3, %v377
    %v379 = vrot.slane %v362, %v378
    %384 = vmatprep.subr.mxu0 %v96
    %385 = vmatpush1.msra.mxu0 %v95
    %386 = vmatprep.subr.mxu0 %v100
    %387 = vmatpush1.msra.mxu0 %v99
    %388 = vmatprep.subr.mxu0 %v104
    %389 = vmatpush1.msra.mxu0 %v103
    %390 = vmatprep.subr.mxu0 %v108
    %391 = vmatpush1.msra.mxu0 %v107
    %392 = vmatprep.subr.mxu0 %v112
    %393 = vmatpush1.msra.mxu0 %v111
    %394 = vmatprep.subr.mxu0 %v116
    %395 = vmatpush1.msra.mxu0 %v115
    %396 = vmatprep.subr.mxu0 %v120
    %397 = vmatpush1.msra.mxu0 %v119
    %398 = vmatprep.subr.mxu0 %v124
    %399 = vmatpush1.msra.mxu0 %v123
    %400 = vmatprep.subr.mxu0 %v128
    %401 = vmatpush1.msra.mxu0 %v127
    %402 = vmatprep.subr.mxu0 %v132
    %403 = vmatpush1.msra.mxu0 %v131
    %404 = vmatprep.subr.mxu0 %v136
    %405 = vmatpush1.msra.mxu0 %v135
    %406 = vmatprep.subr.mxu0 %v140
    %407 = vmatpush1.msra.mxu0 %v139
    %408 = vmatprep.subr.mxu0 %v144
    %409 = vmatpush1.msra.mxu0 %v143
    %410 = vmatprep.subr.mxu0 %v148
    %411 = vmatpush1.msra.mxu0 %v147
    %412 = vmatprep.subr.mxu0 %v152
    %413 = vmatpush1.msra.mxu0 %v151
    %414 = vmatprep.subr.mxu0 %v156
    %415 = vmatpush1.msra.mxu0 %v155
    %416 = vmatprep.subr.mxu0 0.0
    %417 = vmatpush1.msra.mxu0 0.0
    %418 = vmatprep.subr.mxu0 0.0
    %419 = vmatpush1.msra.mxu0 0.0
    %420 = vmatprep.subr.mxu0 0.0
    %421 = vmatpush1.msra.mxu0 0.0
    %422 = vmatprep.subr.mxu0 0.0
    %423 = vmatpush1.msra.mxu0 0.0
    %424 = vmatprep.subr.mxu0 0.0
    %425 = vmatpush1.msra.mxu0 0.0
    %426 = vmatprep.subr.mxu0 0.0
    %427 = vmatpush1.msra.mxu0 0.0
    %428 = vmatprep.subr.mxu0 0.0
    %429 = vmatpush1.msra.mxu0 0.0
    %430 = vmatprep.subr.mxu0 0.0
    %431 = vmatpush1.msra.mxu0 0.0
    %432 = vmatprep.subr.mxu0 0.0
    %433 = vmatpush1.msra.mxu0 0.0
    %434 = vmatprep.subr.mxu0 0.0
    %435 = vmatpush1.msra.mxu0 0.0
    %436 = vmatprep.subr.mxu0 0.0
    %437 = vmatpush1.msra.mxu0 0.0
    %438 = vmatprep.subr.mxu0 0.0
    %439 = vmatpush1.msra.mxu0 0.0
    %440 = vmatprep.subr.mxu0 0.0
    %441 = vmatpush1.msra.mxu0 0.0
    %442 = vmatprep.subr.mxu0 0.0
    %443 = vmatpush1.msra.mxu0 0.0
    %444 = vmatprep.subr.mxu0 0.0
    %445 = vmatpush1.msra.mxu0 0.0
    %446 = vmatprep.subr.mxu0 0.0
    %447 = vmatpush1.msra.mxu0 0.0
    %448 = vmatprep.mubr.f32.mxu0 0.0
    %449 = vmatmul.mubr.f32.gmra.mrb[0].mxu0 %v351
    %v450 = vpop.f32.mrb[0].mxu0
    %v451 = vadd.f32 %v367, %v450
    %v452 = vpop.f32.mrb[0].mxu0
    %v453 = vadd.f32 %v371, %v452
    %454 = vdwg.mxu0
    %455 = vmatprep.subr.mxu0 %v98
    %456 = vmatpush1.msra.mxu0 %v97
    %457 = vmatprep.subr.mxu0 %v102
    %458 = vmatpush1.msra.mxu0 %v101
    %459 = vmatprep.subr.mxu0 %v106
    %460 = vmatpush1.msra.mxu0 %v105
    %461 = vmatprep.subr.mxu0 %v110
    %462 = vmatpush1.msra.mxu0 %v109
    %463 = vmatprep.subr.mxu0 %v114
    %464 = vmatpush1.msra.mxu0 %v113
    %465 = vmatprep.subr.mxu0 %v118
    %466 = vmatpush1.msra.mxu0 %v117
    %467 = vmatprep.subr.mxu0 %v122
    %468 = vmatpush1.msra.mxu0 %v121
    %469 = vmatprep.subr.mxu0 %v126
    %470 = vmatpush1.msra.mxu0 %v125
    %471 = vmatprep.subr.mxu0 %v130
    %472 = vmatpush1.msra.mxu0 %v129
    %473 = vmatprep.subr.mxu0 %v134
    %474 = vmatpush1.msra.mxu0 %v133
    %475 = vmatprep.subr.mxu0 %v138
    %476 = vmatpush1.msra.mxu0 %v137
    %477 = vmatprep.subr.mxu0 %v142
    %478 = vmatpush1.msra.mxu0 %v141
    %479 = vmatprep.subr.mxu0 %v146
    %480 = vmatpush1.msra.mxu0 %v145
    %481 = vmatprep.subr.mxu0 %v150
    %482 = vmatpush1.msra.mxu0 %v149
    %483 = vmatprep.subr.mxu0 %v154
    %484 = vmatpush1.msra.mxu0 %v153
    %485 = vmatprep.subr.mxu0 %v158
    %486 = vmatpush1.msra.mxu0 %v157
    %487 = vmatprep.subr.mxu0 0.0
    %488 = vmatpush1.msra.mxu0 0.0
    %489 = vmatprep.subr.mxu0 0.0
    %490 = vmatpush1.msra.mxu0 0.0
    %491 = vmatprep.subr.mxu0 0.0
    %492 = vmatpush1.msra.mxu0 0.0
    %493 = vmatprep.subr.mxu0 0.0
    %494 = vmatpush1.msra.mxu0 0.0
    %495 = vmatprep.subr.mxu0 0.0
    %496 = vmatpush1.msra.mxu0 0.0
    %497 = vmatprep.subr.mxu0 0.0
    %498 = vmatpush1.msra.mxu0 0.0
    %499 = vmatprep.subr.mxu0 0.0
    %500 = vmatpush1.msra.mxu0 0.0
    %501 = vmatprep.subr.mxu0 0.0
    %502 = vmatpush1.msra.mxu0 0.0
    %503 = vmatprep.subr.mxu0 0.0
    %504 = vmatpush1.msra.mxu0 0.0
    %505 = vmatprep.subr.mxu0 0.0
    %506 = vmatpush1.msra.mxu0 0.0
    %507 = vmatprep.subr.mxu0 0.0
    %508 = vmatpush1.msra.mxu0 0.0
    %509 = vmatprep.subr.mxu0 0.0
    %510 = vmatpush1.msra.mxu0 0.0
    %511 = vmatprep.subr.mxu0 0.0
    %512 = vmatpush1.msra.mxu0 0.0
    %513 = vmatprep.subr.mxu0 0.0
    %514 = vmatpush1.msra.mxu0 0.0
    %515 = vmatprep.subr.mxu0 0.0
    %516 = vmatpush1.msra.mxu0 0.0
    %517 = vmatprep.subr.mxu0 0.0
    %518 = vmatpush1.msra.mxu0 0.0
    %519 = vmatprep.mubr.f32.mxu0 0.0
    %520 = vmatmul.mubr.f32.gmra.mrb[0].mxu0 %v351
    %v521 = vpop.f32.mrb[0].mxu0
    %v522 = vadd.f32 %v375, %v521
    %v523 = vpop.f32.mrb[0].mxu0
    %v524 = vadd.f32 %v379, %v523
    %525 = vdwg.mxu0
    %v526 = vxor.u32 %v451, 2147483648
    %v527 = vmul.f32 %v526, 1.442695
    %v528 = vpow.pop %v527
    %v529 = vadd.f32 %v528, 1.0
    %v530 = vrcp.pop %v529
    %v531 = vmul.f32 1.0, %v530
    %v532 = vxor.u32 %v453, 2147483648
    %v533 = vmul.f32 %v532, 1.442695
    %v534 = vpow.pop %v533
    %v535 = vadd.f32 %v534, 1.0
    %v536 = vrcp.pop %v535
    %v537 = vmul.f32 1.0, %v536
    %v538 = vtanh.pop %v522
    %v539 = vxor.u32 %v524, 2147483648
    %v540 = vmul.f32 %v539, 1.442695
    %v541 = vpow.pop %v540
    %v542 = vadd.f32 %v541, 1.0
    %v543 = vrcp.pop %v542
    %v544 = vmul.f32 1.0, %v543
    %v545 = vmul.f32 %v537, %v350
    %v546 = vmul.f32 %v531, %v538
    %v547 = vadd.f32 %v545, %v546
    %v548 = vtanh.pop %v547
    %v549 = vmul.f32 %v544, %v548
    %p550 = scmp.lt.s32.totalorder %s352, 8
    %s551 = scalar_select %p550, 1, 0
    %v552 = vstv %s551
    %vm553 = vcmp.eq.s32.totalorder %v552, 1
    %v554 = vsel %vm553, %v547, %v350
    %v555 = vsel %vm553, %v549, %v351
    %s556 = sadd.s32 %s84, 2
    %s557 = sld [smem:[#allocation3 + %s556]]
    %s558 = sshra.s32 %s557, 3
    %s559 = sand.u32 %s557, 7
    %s560 = sshra.s32 %s557, 3
    %s561 = sand.u32 %s557, 7
    %s562 = smul.u32 %s558, 4
    %s563 = smul.u32 %s562, 8
    %s564 = sadd.s32 %s563, %s561
    %s565 = scalar_lea.vmem [#allocation4], %s564
    %v566 = vld [vmem:[%s565] ss:$8 sm:$0xf]
    %v568 = vlaneseq
    %v569 = vshrl.u32 %v568, 7
    %v570 = vsub.s32 0, %v569
    %v571 = vrot.slane %v566, %v570
    %v572 = vlaneseq
    %v573 = vshrl.u32 %v572, 7
    %v574 = vsub.s32 1, %v573
    %v575 = vrot.slane %v566, %v574
    %v576 = vlaneseq
    %v577 = vshrl.u32 %v576, 7
    %v578 = vsub.s32 2, %v577
    %v579 = vrot.slane %v566, %v578
    %v580 = vlaneseq
    %v581 = vshrl.u32 %v580, 7
    %v582 = vsub.s32 3, %v581
    %v583 = vrot.slane %v566, %v582
    %588 = vmatprep.subr.mxu0 %v96
    %589 = vmatpush1.msra.mxu0 %v95
    %590 = vmatprep.subr.mxu0 %v100
    %591 = vmatpush1.msra.mxu0 %v99
    %592 = vmatprep.subr.mxu0 %v104
    %593 = vmatpush1.msra.mxu0 %v103
    %594 = vmatprep.subr.mxu0 %v108
    %595 = vmatpush1.msra.mxu0 %v107
    %596 = vmatprep.subr.mxu0 %v112
    %597 = vmatpush1.msra.mxu0 %v111
    %598 = vmatprep.subr.mxu0 %v116
    %599 = vmatpush1.msra.mxu0 %v115
    %600 = vmatprep.subr.mxu0 %v120
    %601 = vmatpush1.msra.mxu0 %v119
    %602 = vmatprep.subr.mxu0 %v124
    %603 = vmatpush1.msra.mxu0 %v123
    %604 = vmatprep.subr.mxu0 %v128
    %605 = vmatpush1.msra.mxu0 %v127
    %606 = vmatprep.subr.mxu0 %v132
    %607 = vmatpush1.msra.mxu0 %v131
    %608 = vmatprep.subr.mxu0 %v136
    %609 = vmatpush1.msra.mxu0 %v135
    %610 = vmatprep.subr.mxu0 %v140
    %611 = vmatpush1.msra.mxu0 %v139
    %612 = vmatprep.subr.mxu0 %v144
    %613 = vmatpush1.msra.mxu0 %v143
    %614 = vmatprep.subr.mxu0 %v148
    %615 = vmatpush1.msra.mxu0 %v147
    %616 = vmatprep.subr.mxu0 %v152
    %617 = vmatpush1.msra.mxu0 %v151
    %618 = vmatprep.subr.mxu0 %v156
    %619 = vmatpush1.msra.mxu0 %v155
    %620 = vmatprep.subr.mxu0 0.0
    %621 = vmatpush1.msra.mxu0 0.0
    %622 = vmatprep.subr.mxu0 0.0
    %623 = vmatpush1.msra.mxu0 0.0
    %624 = vmatprep.subr.mxu0 0.0
    %625 = vmatpush1.msra.mxu0 0.0
    %626 = vmatprep.subr.mxu0 0.0
    %627 = vmatpush1.msra.mxu0 0.0
    %628 = vmatprep.subr.mxu0 0.0
    %629 = vmatpush1.msra.mxu0 0.0
    %630 = vmatprep.subr.mxu0 0.0
    %631 = vmatpush1.msra.mxu0 0.0
    %632 = vmatprep.subr.mxu0 0.0
    %633 = vmatpush1.msra.mxu0 0.0
    %634 = vmatprep.subr.mxu0 0.0
    %635 = vmatpush1.msra.mxu0 0.0
    %636 = vmatprep.subr.mxu0 0.0
    %637 = vmatpush1.msra.mxu0 0.0
    %638 = vmatprep.subr.mxu0 0.0
    %639 = vmatpush1.msra.mxu0 0.0
    %640 = vmatprep.subr.mxu0 0.0
    %641 = vmatpush1.msra.mxu0 0.0
    %642 = vmatprep.subr.mxu0 0.0
    %643 = vmatpush1.msra.mxu0 0.0
    %644 = vmatprep.subr.mxu0 0.0
    %645 = vmatpush1.msra.mxu0 0.0
    %646 = vmatprep.subr.mxu0 0.0
    %647 = vmatpush1.msra.mxu0 0.0
    %648 = vmatprep.subr.mxu0 0.0
    %649 = vmatpush1.msra.mxu0 0.0
    %650 = vmatprep.subr.mxu0 0.0
    %651 = vmatpush1.msra.mxu0 0.0
    %652 = vmatprep.mubr.f32.mxu0 0.0
    %653 = vmatmul.mubr.f32.gmra.mrb[0].mxu0 %v555
    %v654 = vpop.f32.mrb[0].mxu0
    %v655 = vadd.f32 %v571, %v654
    %v656 = vpop.f32.mrb[0].mxu0
    %v657 = vadd.f32 %v575, %v656
    %658 = vdwg.mxu0
    %659 = vmatprep.subr.mxu0 %v98
    %660 = vmatpush1.msra.mxu0 %v97
    %661 = vmatprep.subr.mxu0 %v102
    %662 = vmatpush1.msra.mxu0 %v101
    %663 = vmatprep.subr.mxu0 %v106
    %664 = vmatpush1.msra.mxu0 %v105
    %665 = vmatprep.subr.mxu0 %v110
    %666 = vmatpush1.msra.mxu0 %v109
    %667 = vmatprep.subr.mxu0 %v114
    %668 = vmatpush1.msra.mxu0 %v113
    %669 = vmatprep.subr.mxu0 %v118
    %670 = vmatpush1.msra.mxu0 %v117
    %671 = vmatprep.subr.mxu0 %v122
    %672 = vmatpush1.msra.mxu0 %v121
    %673 = vmatprep.subr.mxu0 %v126
    %674 = vmatpush1.msra.mxu0 %v125
    %675 = vmatprep.subr.mxu0 %v130
    %676 = vmatpush1.msra.mxu0 %v129
    %677 = vmatprep.subr.mxu0 %v134
    %678 = vmatpush1.msra.mxu0 %v133
    %679 = vmatprep.subr.mxu0 %v138
    %680 = vmatpush1.msra.mxu0 %v137
    %681 = vmatprep.subr.mxu0 %v142
    %682 = vmatpush1.msra.mxu0 %v141
    %683 = vmatprep.subr.mxu0 %v146
    %684 = vmatpush1.msra.mxu0 %v145
    %685 = vmatprep.subr.mxu0 %v150
    %686 = vmatpush1.msra.mxu0 %v149
    %687 = vmatprep.subr.mxu0 %v154
    %688 = vmatpush1.msra.mxu0 %v153
    %689 = vmatprep.subr.mxu0 %v158
    %690 = vmatpush1.msra.mxu0 %v157
    %691 = vmatprep.subr.mxu0 0.0
    %692 = vmatpush1.msra.mxu0 0.0
    %693 = vmatprep.subr.mxu0 0.0
    %694 = vmatpush1.msra.mxu0 0.0
    %695 = vmatprep.subr.mxu0 0.0
    %696 = vmatpush1.msra.mxu0 0.0
    %697 = vmatprep.subr.mxu0 0.0
    %698 = vmatpush1.msra.mxu0 0.0
    %699 = vmatprep.subr.mxu0 0.0
    %700 = vmatpush1.msra.mxu0 0.0
    %701 = vmatprep.subr.mxu0 0.0
    %702 = vmatpush1.msra.mxu0 0.0
    %703 = vmatprep.subr.mxu0 0.0
    %704 = vmatpush1.msra.mxu0 0.0
    %705 = vmatprep.subr.mxu0 0.0
    %706 = vmatpush1.msra.mxu0 0.0
    %707 = vmatprep.subr.mxu0 0.0
    %708 = vmatpush1.msra.mxu0 0.0
    %709 = vmatprep.subr.mxu0 0.0
    %710 = vmatpush1.msra.mxu0 0.0
    %711 = vmatprep.subr.mxu0 0.0
    %712 = vmatpush1.msra.mxu0 0.0
    %713 = vmatprep.subr.mxu0 0.0
    %714 = vmatpush1.msra.mxu0 0.0
    %715 = vmatprep.subr.mxu0 0.0
    %716 = vmatpush1.msra.mxu0 0.0
    %717 = vmatprep.subr.mxu0 0.0
    %718 = vmatpush1.msra.mxu0 0.0
    %719 = vmatprep.subr.mxu0 0.0
    %720 = vmatpush1.msra.mxu0 0.0
    %721 = vmatprep.subr.mxu0 0.0
    %722 = vmatpush1.msra.mxu0 0.0
    %723 = vmatprep.mubr.f32.mxu0 0.0
    %724 = vmatmul.mubr.f32.gmra.mrb[0].mxu0 %v555
    %v725 = vpop.f32.mrb[0].mxu0
    %v726 = vadd.f32 %v579, %v725
    %v727 = vpop.f32.mrb[0].mxu0
    %v728 = vadd.f32 %v583, %v727
    %729 = vdwg.mxu0
    %v730 = vxor.u32 %v655, 2147483648
    %v731 = vmul.f32 %v730, 1.442695
    %v732 = vpow.pop %v731
    %v733 = vadd.f32 %v732, 1.0
    %v734 = vrcp.pop %v733
    %v735 = vmul.f32 1.0, %v734
    %v736 = vxor.u32 %v657, 2147483648
    %v737 = vmul.f32 %v736, 1.442695
    %v738 = vpow.pop %v737
    %v739 = vadd.f32 %v738, 1.0
    %v740 = vrcp.pop %v739
    %v741 = vmul.f32 1.0, %v740
    %v742 = vtanh.pop %v726
    %v743 = vxor.u32 %v728, 2147483648
    %v744 = vmul.f32 %v743, 1.442695
    %v745 = vpow.pop %v744
    %v746 = vadd.f32 %v745, 1.0
    %v747 = vrcp.pop %v746
    %v748 = vmul.f32 1.0, %v747
    %v749 = vmul.f32 %v741, %v554
    %v750 = vmul.f32 %v735, %v742
    %v751 = vadd.f32 %v749, %v750
    %v752 = vtanh.pop %v751
    %v753 = vmul.f32 %v748, %v752
    %p754 = scmp.lt.s32.totalorder %s556, 8
    %s755 = scalar_select %p754, 1, 0
    %v756 = vstv %s755
    %vm757 = vcmp.eq.s32.totalorder %v756, 1
    %v758 = vsel %vm757, %v751, %v554
    %v759 = vsel %vm757, %v753, %v555
    %s760 = sadd.s32 %s84, 3
    %s761 = sld [smem:[#allocation3 + %s760]]
    %s762 = sshra.s32 %s761, 3
    %s763 = sand.u32 %s761, 7
    %s764 = sshra.s32 %s761, 3
    %s765 = sand.u32 %s761, 7
    %s766 = smul.u32 %s762, 4
    %s767 = smul.u32 %s766, 8
    %s768 = sadd.s32 %s767, %s765
    %s769 = scalar_lea.vmem [#allocation4], %s768
    %v770 = vld [vmem:[%s769] ss:$8 sm:$0xf]
    %v772 = vlaneseq
    %v773 = vshrl.u32 %v772, 7
    %v774 = vsub.s32 0, %v773
    %v775 = vrot.slane %v770, %v774
    %v776 = vlaneseq
    %v777 = vshrl.u32 %v776, 7
    %v778 = vsub.s32 1, %v777
    %v779 = vrot.slane %v770, %v778
    %v780 = vlaneseq
    %v781 = vshrl.u32 %v780, 7
    %v782 = vsub.s32 2, %v781
    %v783 = vrot.slane %v770, %v782
    %v784 = vlaneseq
    %v785 = vshrl.u32 %v784, 7
    %v786 = vsub.s32 3, %v785
    %v787 = vrot.slane %v770, %v786
    %792 = vmatprep.subr.mxu0 %v96
    %793 = vmatpush1.msra.mxu0 %v95
    %794 = vmatprep.subr.mxu0 %v100
    %795 = vmatpush1.msra.mxu0 %v99
    %796 = vmatprep.subr.mxu0 %v104
    %797 = vmatpush1.msra.mxu0 %v103
    %798 = vmatprep.subr.mxu0 %v108
    %799 = vmatpush1.msra.mxu0 %v107
    %800 = vmatprep.subr.mxu0 %v112
    %801 = vmatpush1.msra.mxu0 %v111
    %802 = vmatprep.subr.mxu0 %v116
    %803 = vmatpush1.msra.mxu0 %v115
    %804 = vmatprep.subr.mxu0 %v120
    %805 = vmatpush1.msra.mxu0 %v119
    %806 = vmatprep.subr.mxu0 %v124
    %807 = vmatpush1.msra.mxu0 %v123
    %808 = vmatprep.subr.mxu0 %v128
    %809 = vmatpush1.msra.mxu0 %v127
    %810 = vmatprep.subr.mxu0 %v132
    %811 = vmatpush1.msra.mxu0 %v131
    %812 = vmatprep.subr.mxu0 %v136
    %813 = vmatpush1.msra.mxu0 %v135
    %814 = vmatprep.subr.mxu0 %v140
    %815 = vmatpush1.msra.mxu0 %v139
    %816 = vmatprep.subr.mxu0 %v144
    %817 = vmatpush1.msra.mxu0 %v143
    %818 = vmatprep.subr.mxu0 %v148
    %819 = vmatpush1.msra.mxu0 %v147
    %820 = vmatprep.subr.mxu0 %v152
    %821 = vmatpush1.msra.mxu0 %v151
    %822 = vmatprep.subr.mxu0 %v156
    %823 = vmatpush1.msra.mxu0 %v155
    %824 = vmatprep.subr.mxu0 0.0
    %825 = vmatpush1.msra.mxu0 0.0
    %826 = vmatprep.subr.mxu0 0.0
    %827 = vmatpush1.msra.mxu0 0.0
    %828 = vmatprep.subr.mxu0 0.0
    %829 = vmatpush1.msra.mxu0 0.0
    %830 = vmatprep.subr.mxu0 0.0
    %831 = vmatpush1.msra.mxu0 0.0
    %832 = vmatprep.subr.mxu0 0.0
    %833 = vmatpush1.msra.mxu0 0.0
    %834 = vmatprep.subr.mxu0 0.0
    %835 = vmatpush1.msra.mxu0 0.0
    %836 = vmatprep.subr.mxu0 0.0
    %837 = vmatpush1.msra.mxu0 0.0
    %838 = vmatprep.subr.mxu0 0.0
    %839 = vmatpush1.msra.mxu0 0.0
    %840 = vmatprep.subr.mxu0 0.0
    %841 = vmatpush1.msra.mxu0 0.0
    %842 = vmatprep.subr.mxu0 0.0
    %843 = vmatpush1.msra.mxu0 0.0
    %844 = vmatprep.subr.mxu0 0.0
    %845 = vmatpush1.msra.mxu0 0.0
    %846 = vmatprep.subr.mxu0 0.0
    %847 = vmatpush1.msra.mxu0 0.0
    %848 = vmatprep.subr.mxu0 0.0
    %849 = vmatpush1.msra.mxu0 0.0
    %850 = vmatprep.subr.mxu0 0.0
    %851 = vmatpush1.msra.mxu0 0.0
    %852 = vmatprep.subr.mxu0 0.0
    %853 = vmatpush1.msra.mxu0 0.0
    %854 = vmatprep.subr.mxu0 0.0
    %855 = vmatpush1.msra.mxu0 0.0
    %856 = vmatprep.mubr.f32.mxu0 0.0
    %857 = vmatmul.mubr.f32.gmra.mrb[0].mxu0 %v759
    %v858 = vpop.f32.mrb[0].mxu0
    %v859 = vadd.f32 %v775, %v858
    %v860 = vpop.f32.mrb[0].mxu0
    %v861 = vadd.f32 %v779, %v860
    %862 = vdwg.mxu0
    %863 = vmatprep.subr.mxu0 %v98
    %864 = vmatpush1.msra.mxu0 %v97
    %865 = vmatprep.subr.mxu0 %v102
    %866 = vmatpush1.msra.mxu0 %v101
    %867 = vmatprep.subr.mxu0 %v106
    %868 = vmatpush1.msra.mxu0 %v105
    %869 = vmatprep.subr.mxu0 %v110
    %870 = vmatpush1.msra.mxu0 %v109
    %871 = vmatprep.subr.mxu0 %v114
    %872 = vmatpush1.msra.mxu0 %v113
    %873 = vmatprep.subr.mxu0 %v118
    %874 = vmatpush1.msra.mxu0 %v117
    %875 = vmatprep.subr.mxu0 %v122
    %876 = vmatpush1.msra.mxu0 %v121
    %877 = vmatprep.subr.mxu0 %v126
    %878 = vmatpush1.msra.mxu0 %v125
    %879 = vmatprep.subr.mxu0 %v130
    %880 = vmatpush1.msra.mxu0 %v129
    %881 = vmatprep.subr.mxu0 %v134
    %882 = vmatpush1.msra.mxu0 %v133
    %883 = vmatprep.subr.mxu0 %v138
    %884 = vmatpush1.msra.mxu0 %v137
    %885 = vmatprep.subr.mxu0 %v142
    %886 = vmatpush1.msra.mxu0 %v141
    %887 = vmatprep.subr.mxu0 %v146
    %888 = vmatpush1.msra.mxu0 %v145
    %889 = vmatprep.subr.mxu0 %v150
    %890 = vmatpush1.msra.mxu0 %v149
    %891 = vmatprep.subr.mxu0 %v154
    %892 = vmatpush1.msra.mxu0 %v153
    %893 = vmatprep.subr.mxu0 %v158
    %894 = vmatpush1.msra.mxu0 %v157
    %895 = vmatprep.subr.mxu0 0.0
    %896 = vmatpush1.msra.mxu0 0.0
    %897 = vmatprep.subr.mxu0 0.0
    %898 = vmatpush1.msra.mxu0 0.0
    %899 = vmatprep.subr.mxu0 0.0
    %900 = vmatpush1.msra.mxu0 0.0
    %901 = vmatprep.subr.mxu0 0.0
    %902 = vmatpush1.msra.mxu0 0.0
    %903 = vmatprep.subr.mxu0 0.0
    %904 = vmatpush1.msra.mxu0 0.0
    %905 = vmatprep.subr.mxu0 0.0
    %906 = vmatpush1.msra.mxu0 0.0
    %907 = vmatprep.subr.mxu0 0.0
    %908 = vmatpush1.msra.mxu0 0.0
    %909 = vmatprep.subr.mxu0 0.0
    %910 = vmatpush1.msra.mxu0 0.0
    %911 = vmatprep.subr.mxu0 0.0
    %912 = vmatpush1.msra.mxu0 0.0
    %913 = vmatprep.subr.mxu0 0.0
    %914 = vmatpush1.msra.mxu0 0.0
    %915 = vmatprep.subr.mxu0 0.0
    %916 = vmatpush1.msra.mxu0 0.0
    %917 = vmatprep.subr.mxu0 0.0
    %918 = vmatpush1.msra.mxu0 0.0
    %919 = vmatprep.subr.mxu0 0.0
    %920 = vmatpush1.msra.mxu0 0.0
    %921 = vmatprep.subr.mxu0 0.0
    %922 = vmatpush1.msra.mxu0 0.0
    %923 = vmatprep.subr.mxu0 0.0
    %924 = vmatpush1.msra.mxu0 0.0
    %925 = vmatprep.subr.mxu0 0.0
    %926 = vmatpush1.msra.mxu0 0.0
    %927 = vmatprep.mubr.f32.mxu0 0.0
    %928 = vmatmul.mubr.f32.gmra.mrb[0].mxu0 %v759
    %v929 = vpop.f32.mrb[0].mxu0
    %v930 = vadd.f32 %v783, %v929
    %v931 = vpop.f32.mrb[0].mxu0
    %v932 = vadd.f32 %v787, %v931
    %933 = vdwg.mxu0
    %v934 = vxor.u32 %v859, 2147483648
    %v935 = vmul.f32 %v934, 1.442695
    %v936 = vpow.pop %v935
    %v937 = vadd.f32 %v936, 1.0
    %v938 = vrcp.pop %v937
    %v939 = vmul.f32 1.0, %v938
    %v940 = vxor.u32 %v861, 2147483648
    %v941 = vmul.f32 %v940, 1.442695
    %v942 = vpow.pop %v941
    %v943 = vadd.f32 %v942, 1.0
    %v944 = vrcp.pop %v943
    %v945 = vmul.f32 1.0, %v944
    %v946 = vtanh.pop %v930
    %v947 = vxor.u32 %v932, 2147483648
    %v948 = vmul.f32 %v947, 1.442695
    %v949 = vpow.pop %v948
    %v950 = vadd.f32 %v949, 1.0
    %v951 = vrcp.pop %v950
    %v952 = vmul.f32 1.0, %v951
    %v953 = vmul.f32 %v945, %v758
    %v954 = vmul.f32 %v939, %v946
    %v955 = vadd.f32 %v953, %v954
    %v956 = vtanh.pop %v955
    %v957 = vmul.f32 %v952, %v956
    %p958 = scmp.lt.s32.totalorder %s760, 8
    %s959 = scalar_select %p958, 1, 0
    %v960 = vstv %s959
    %vm961 = vcmp.eq.s32.totalorder %v960, 1
    %v962 = vsel %vm961, %v955, %v758
    %v963 = vsel %vm961, %v957, %v759
    %s964 = sadd.s32 %s84, 4
    %s965 = sld [smem:[#allocation3 + %s964]]
    %s966 = sshra.s32 %s965, 3
    %s967 = sand.u32 %s965, 7
    %s968 = sshra.s32 %s965, 3
    %s969 = sand.u32 %s965, 7
    %s970 = smul.u32 %s966, 4
    %s971 = smul.u32 %s970, 8
    %s972 = sadd.s32 %s971, %s969
    %s973 = scalar_lea.vmem [#allocation4], %s972
    %v974 = vld [vmem:[%s973] ss:$8 sm:$0xf]
    %v976 = vlaneseq
    %v977 = vshrl.u32 %v976, 7
    %v978 = vsub.s32 0, %v977
    %v979 = vrot.slane %v974, %v978
    %v980 = vlaneseq
    %v981 = vshrl.u32 %v980, 7
    %v982 = vsub.s32 1, %v981
    %v983 = vrot.slane %v974, %v982
    %v984 = vlaneseq
    %v985 = vshrl.u32 %v984, 7
    %v986 = vsub.s32 2, %v985
    %v987 = vrot.slane %v974, %v986
    %v988 = vlaneseq
    %v989 = vshrl.u32 %v988, 7
    %v990 = vsub.s32 3, %v989
    %v991 = vrot.slane %v974, %v990
    %996 = vmatprep.subr.mxu0 %v96
    %997 = vmatpush1.msra.mxu0 %v95
    %998 = vmatprep.subr.mxu0 %v100
    %999 = vmatpush1.msra.mxu0 %v99
    %1000 = vmatprep.subr.mxu0 %v104
    %1001 = vmatpush1.msra.mxu0 %v103
    %1002 = vmatprep.subr.mxu0 %v108
    %1003 = vmatpush1.msra.mxu0 %v107
    %1004 = vmatprep.subr.mxu0 %v112
    %1005 = vmatpush1.msra.mxu0 %v111
    %1006 = vmatprep.subr.mxu0 %v116
    %1007 = vmatpush1.msra.mxu0 %v115
    %1008 = vmatprep.subr.mxu0 %v120
    %1009 = vmatpush1.msra.mxu0 %v119
    %1010 = vmatprep.subr.mxu0 %v124
    %1011 = vmatpush1.msra.mxu0 %v123
    %1012 = vmatprep.subr.mxu0 %v128
    %1013 = vmatpush1.msra.mxu0 %v127
    %1014 = vmatprep.subr.mxu0 %v132
    %1015 = vmatpush1.msra.mxu0 %v131
    %1016 = vmatprep.subr.mxu0 %v136
    %1017 = vmatpush1.msra.mxu0 %v135
    %1018 = vmatprep.subr.mxu0 %v140
    %1019 = vmatpush1.msra.mxu0 %v139
    %1020 = vmatprep.subr.mxu0 %v144
    %1021 = vmatpush1.msra.mxu0 %v143
    %1022 = vmatprep.subr.mxu0 %v148
    %1023 = vmatpush1.msra.mxu0 %v147
    %1024 = vmatprep.subr.mxu0 %v152
    %1025 = vmatpush1.msra.mxu0 %v151
    %1026 = vmatprep.subr.mxu0 %v156
    %1027 = vmatpush1.msra.mxu0 %v155
    %1028 = vmatprep.subr.mxu0 0.0
    %1029 = vmatpush1.msra.mxu0 0.0
    %1030 = vmatprep.subr.mxu0 0.0
    %1031 = vmatpush1.msra.mxu0 0.0
    %1032 = vmatprep.subr.mxu0 0.0
    %1033 = vmatpush1.msra.mxu0 0.0
    %1034 = vmatprep.subr.mxu0 0.0
    %1035 = vmatpush1.msra.mxu0 0.0
    %1036 = vmatprep.subr.mxu0 0.0
    %1037 = vmatpush1.msra.mxu0 0.0
    %1038 = vmatprep.subr.mxu0 0.0
    %1039 = vmatpush1.msra.mxu0 0.0
    %1040 = vmatprep.subr.mxu0 0.0
    %1041 = vmatpush1.msra.mxu0 0.0
    %1042 = vmatprep.subr.mxu0 0.0
    %1043 = vmatpush1.msra.mxu0 0.0
    %1044 = vmatprep.subr.mxu0 0.0
    %1045 = vmatpush1.msra.mxu0 0.0
    %1046 = vmatprep.subr.mxu0 0.0
    %1047 = vmatpush1.msra.mxu0 0.0
    %1048 = vmatprep.subr.mxu0 0.0
    %1049 = vmatpush1.msra.mxu0 0.0
    %1050 = vmatprep.subr.mxu0 0.0
    %1051 = vmatpush1.msra.mxu0 0.0
    %1052 = vmatprep.subr.mxu0 0.0
    %1053 = vmatpush1.msra.mxu0 0.0
    %1054 = vmatprep.subr.mxu0 0.0
    %1055 = vmatpush1.msra.mxu0 0.0
    %1056 = vmatprep.subr.mxu0 0.0
    %1057 = vmatpush1.msra.mxu0 0.0
    %1058 = vmatprep.subr.mxu0 0.0
    %1059 = vmatpush1.msra.mxu0 0.0
    %1060 = vmatprep.mubr.f32.mxu0 0.0
    %1061 = vmatmul.mubr.f32.gmra.mrb[0].mxu0 %v963
    %v1062 = vpop.f32.mrb[0].mxu0
    %v1063 = vadd.f32 %v979, %v1062
    %v1064 = vpop.f32.mrb[0].mxu0
    %v1065 = vadd.f32 %v983, %v1064
    %1066 = vdwg.mxu0
    %1067 = vmatprep.subr.mxu0 %v98
    %1068 = vmatpush1.msra.mxu0 %v97
    %1069 = vmatprep.subr.mxu0 %v102
    %1070 = vmatpush1.msra.mxu0 %v101
    %1071 = vmatprep.subr.mxu0 %v106
    %1072 = vmatpush1.msra.mxu0 %v105
    %1073 = vmatprep.subr.mxu0 %v110
    %1074 = vmatpush1.msra.mxu0 %v109
    %1075 = vmatprep.subr.mxu0 %v114
    %1076 = vmatpush1.msra.mxu0 %v113
    %1077 = vmatprep.subr.mxu0 %v118
    %1078 = vmatpush1.msra.mxu0 %v117
    %1079 = vmatprep.subr.mxu0 %v122
    %1080 = vmatpush1.msra.mxu0 %v121
    %1081 = vmatprep.subr.mxu0 %v126
    %1082 = vmatpush1.msra.mxu0 %v125
    %1083 = vmatprep.subr.mxu0 %v130
    %1084 = vmatpush1.msra.mxu0 %v129
    %1085 = vmatprep.subr.mxu0 %v134
    %1086 = vmatpush1.msra.mxu0 %v133
    %1087 = vmatprep.subr.mxu0 %v138
    %1088 = vmatpush1.msra.mxu0 %v137
    %1089 = vmatprep.subr.mxu0 %v142
    %1090 = vmatpush1.msra.mxu0 %v141
    %1091 = vmatprep.subr.mxu0 %v146
    %1092 = vmatpush1.msra.mxu0 %v145
    %1093 = vmatprep.subr.mxu0 %v150
    %1094 = vmatpush1.msra.mxu0 %v149
    %1095 = vmatprep.subr.mxu0 %v154
    %1096 = vmatpush1.msra.mxu0 %v153
    %1097 = vmatprep.subr.mxu0 %v158
    %1098 = vmatpush1.msra.mxu0 %v157
    %1099 = vmatprep.subr.mxu0 0.0
    %1100 = vmatpush1.msra.mxu0 0.0
    %1101 = vmatprep.subr.mxu0 0.0
    %1102 = vmatpush1.msra.mxu0 0.0
    %1103 = vmatprep.subr.mxu0 0.0
    %1104 = vmatpush1.msra.mxu0 0.0
    %1105 = vmatprep.subr.mxu0 0.0
    %1106 = vmatpush1.msra.mxu0 0.0
    %1107 = vmatprep.subr.mxu0 0.0
    %1108 = vmatpush1.msra.mxu0 0.0
    %1109 = vmatprep.subr.mxu0 0.0
    %1110 = vmatpush1.msra.mxu0 0.0
    %1111 = vmatprep.subr.mxu0 0.0
    %1112 = vmatpush1.msra.mxu0 0.0
    %1113 = vmatprep.subr.mxu0 0.0
    %1114 = vmatpush1.msra.mxu0 0.0
    %1115 = vmatprep.subr.mxu0 0.0
    %1116 = vmatpush1.msra.mxu0 0.0
    %1117 = vmatprep.subr.mxu0 0.0
    %1118 = vmatpush1.msra.mxu0 0.0
    %1119 = vmatprep.subr.mxu0 0.0
    %1120 = vmatpush1.msra.mxu0 0.0
    %1121 = vmatprep.subr.mxu0 0.0
    %1122 = vmatpush1.msra.mxu0 0.0
    %1123 = vmatprep.subr.mxu0 0.0
    %1124 = vmatpush1.msra.mxu0 0.0
    %1125 = vmatprep.subr.mxu0 0.0
    %1126 = vmatpush1.msra.mxu0 0.0
    %1127 = vmatprep.subr.mxu0 0.0
    %1128 = vmatpush1.msra.mxu0 0.0
    %1129 = vmatprep.subr.mxu0 0.0
    %1130 = vmatpush1.msra.mxu0 0.0
    %1131 = vmatprep.mubr.f32.mxu0 0.0
    %1132 = vmatmul.mubr.f32.gmra.mrb[0].mxu0 %v963
    %v1133 = vpop.f32.mrb[0].mxu0
    %v1134 = vadd.f32 %v987, %v1133
    %v1135 = vpop.f32.mrb[0].mxu0
    %v1136 = vadd.f32 %v991, %v1135
    %1137 = vdwg.mxu0
    %v1138 = vxor.u32 %v1063, 2147483648
    %v1139 = vmul.f32 %v1138, 1.442695
    %v1140 = vpow.pop %v1139
    %v1141 = vadd.f32 %v1140, 1.0
    %v1142 = vrcp.pop %v1141
    %v1143 = vmul.f32 1.0, %v1142
    %v1144 = vxor.u32 %v1065, 2147483648
    %v1145 = vmul.f32 %v1144, 1.442695
    %v1146 = vpow.pop %v1145
    %v1147 = vadd.f32 %v1146, 1.0
    %v1148 = vrcp.pop %v1147
    %v1149 = vmul.f32 1.0, %v1148
    %v1150 = vtanh.pop %v1134
    %v1151 = vxor.u32 %v1136, 2147483648
    %v1152 = vmul.f32 %v1151, 1.442695
    %v1153 = vpow.pop %v1152
    %v1154 = vadd.f32 %v1153, 1.0
    %v1155 = vrcp.pop %v1154
    %v1156 = vmul.f32 1.0, %v1155
    %v1157 = vmul.f32 %v1149, %v962
    %v1158 = vmul.f32 %v1143, %v1150
    %v1159 = vadd.f32 %v1157, %v1158
    %v1160 = vtanh.pop %v1159
    %v1161 = vmul.f32 %v1156, %v1160
    %p1162 = scmp.lt.s32.totalorder %s964, 8
    %s1163 = scalar_select %p1162, 1, 0
    %v1164 = vstv %s1163
    %vm1165 = vcmp.eq.s32.totalorder %v1164, 1
    %v1166 = vsel %vm1165, %v1159, %v962
    %v1167 = vsel %vm1165, %v1161, %v963
    %s1168 = sadd.s32 %s84, 5
    %s1169 = sld [smem:[#allocation3 + %s1168]]
    %s1170 = sshra.s32 %s1169, 3
    %s1171 = sand.u32 %s1169, 7
    %s1172 = sshra.s32 %s1169, 3
    %s1173 = sand.u32 %s1169, 7
    %s1174 = smul.u32 %s1170, 4
    %s1175 = smul.u32 %s1174, 8
    %s1176 = sadd.s32 %s1175, %s1173
    %s1177 = scalar_lea.vmem [#allocation4], %s1176
    %v1178 = vld [vmem:[%s1177] ss:$8 sm:$0xf]
    %v1180 = vlaneseq
    %v1181 = vshrl.u32 %v1180, 7
    %v1182 = vsub.s32 0, %v1181
    %v1183 = vrot.slane %v1178, %v1182
    %v1184 = vlaneseq
    %v1185 = vshrl.u32 %v1184, 7
    %v1186 = vsub.s32 1, %v1185
    %v1187 = vrot.slane %v1178, %v1186
    %v1188 = vlaneseq
    %v1189 = vshrl.u32 %v1188, 7
    %v1190 = vsub.s32 2, %v1189
    %v1191 = vrot.slane %v1178, %v1190
    %v1192 = vlaneseq
    %v1193 = vshrl.u32 %v1192, 7
    %v1194 = vsub.s32 3, %v1193
    %v1195 = vrot.slane %v1178, %v1194
    %1200 = vmatprep.subr.mxu0 %v96
    %1201 = vmatpush1.msra.mxu0 %v95
    %1202 = vmatprep.subr.mxu0 %v100
    %1203 = vmatpush1.msra.mxu0 %v99
    %1204 = vmatprep.subr.mxu0 %v104
    %1205 = vmatpush1.msra.mxu0 %v103
    %1206 = vmatprep.subr.mxu0 %v108
    %1207 = vmatpush1.msra.mxu0 %v107
    %1208 = vmatprep.subr.mxu0 %v112
    %1209 = vmatpush1.msra.mxu0 %v111
    %1210 = vmatprep.subr.mxu0 %v116
    %1211 = vmatpush1.msra.mxu0 %v115
    %1212 = vmatprep.subr.mxu0 %v120
    %1213 = vmatpush1.msra.mxu0 %v119
    %1214 = vmatprep.subr.mxu0 %v124
    %1215 = vmatpush1.msra.mxu0 %v123
    %1216 = vmatprep.subr.mxu0 %v128
    %1217 = vmatpush1.msra.mxu0 %v127
    %1218 = vmatprep.subr.mxu0 %v132
    %1219 = vmatpush1.msra.mxu0 %v131
    %1220 = vmatprep.subr.mxu0 %v136
    %1221 = vmatpush1.msra.mxu0 %v135
    %1222 = vmatprep.subr.mxu0 %v140
    %1223 = vmatpush1.msra.mxu0 %v139
    %1224 = vmatprep.subr.mxu0 %v144
    %1225 = vmatpush1.msra.mxu0 %v143
    %1226 = vmatprep.subr.mxu0 %v148
    %1227 = vmatpush1.msra.mxu0 %v147
    %1228 = vmatprep.subr.mxu0 %v152
    %1229 = vmatpush1.msra.mxu0 %v151
    %1230 = vmatprep.subr.mxu0 %v156
    %1231 = vmatpush1.msra.mxu0 %v155
    %1232 = vmatprep.subr.mxu0 0.0
    %1233 = vmatpush1.msra.mxu0 0.0
    %1234 = vmatprep.subr.mxu0 0.0
    %1235 = vmatpush1.msra.mxu0 0.0
    %1236 = vmatprep.subr.mxu0 0.0
    %1237 = vmatpush1.msra.mxu0 0.0
    %1238 = vmatprep.subr.mxu0 0.0
    %1239 = vmatpush1.msra.mxu0 0.0
    %1240 = vmatprep.subr.mxu0 0.0
    %1241 = vmatpush1.msra.mxu0 0.0
    %1242 = vmatprep.subr.mxu0 0.0
    %1243 = vmatpush1.msra.mxu0 0.0
    %1244 = vmatprep.subr.mxu0 0.0
    %1245 = vmatpush1.msra.mxu0 0.0
    %1246 = vmatprep.subr.mxu0 0.0
    %1247 = vmatpush1.msra.mxu0 0.0
    %1248 = vmatprep.subr.mxu0 0.0
    %1249 = vmatpush1.msra.mxu0 0.0
    %1250 = vmatprep.subr.mxu0 0.0
    %1251 = vmatpush1.msra.mxu0 0.0
    %1252 = vmatprep.subr.mxu0 0.0
    %1253 = vmatpush1.msra.mxu0 0.0
    %1254 = vmatprep.subr.mxu0 0.0
    %1255 = vmatpush1.msra.mxu0 0.0
    %1256 = vmatprep.subr.mxu0 0.0
    %1257 = vmatpush1.msra.mxu0 0.0
    %1258 = vmatprep.subr.mxu0 0.0
    %1259 = vmatpush1.msra.mxu0 0.0
    %1260 = vmatprep.subr.mxu0 0.0
    %1261 = vmatpush1.msra.mxu0 0.0
    %1262 = vmatprep.subr.mxu0 0.0
    %1263 = vmatpush1.msra.mxu0 0.0
    %1264 = vmatprep.mubr.f32.mxu0 0.0
    %1265 = vmatmul.mubr.f32.gmra.mrb[0].mxu0 %v1167
    %v1266 = vpop.f32.mrb[0].mxu0
    %v1267 = vadd.f32 %v1183, %v1266
    %v1268 = vpop.f32.mrb[0].mxu0
    %v1269 = vadd.f32 %v1187, %v1268
    %1270 = vdwg.mxu0
    %1271 = vmatprep.subr.mxu0 %v98
    %1272 = vmatpush1.msra.mxu0 %v97
    %1273 = vmatprep.subr.mxu0 %v102
    %1274 = vmatpush1.msra.mxu0 %v101
    %1275 = vmatprep.subr.mxu0 %v106
    %1276 = vmatpush1.msra.mxu0 %v105
    %1277 = vmatprep.subr.mxu0 %v110
    %1278 = vmatpush1.msra.mxu0 %v109
    %1279 = vmatprep.subr.mxu0 %v114
    %1280 = vmatpush1.msra.mxu0 %v113
    %1281 = vmatprep.subr.mxu0 %v118
    %1282 = vmatpush1.msra.mxu0 %v117
    %1283 = vmatprep.subr.mxu0 %v122
    %1284 = vmatpush1.msra.mxu0 %v121
    %1285 = vmatprep.subr.mxu0 %v126
    %1286 = vmatpush1.msra.mxu0 %v125
    %1287 = vmatprep.subr.mxu0 %v130
    %1288 = vmatpush1.msra.mxu0 %v129
    %1289 = vmatprep.subr.mxu0 %v134
    %1290 = vmatpush1.msra.mxu0 %v133
    %1291 = vmatprep.subr.mxu0 %v138
    %1292 = vmatpush1.msra.mxu0 %v137
    %1293 = vmatprep.subr.mxu0 %v142
    %1294 = vmatpush1.msra.mxu0 %v141
    %1295 = vmatprep.subr.mxu0 %v146
    %1296 = vmatpush1.msra.mxu0 %v145
    %1297 = vmatprep.subr.mxu0 %v150
    %1298 = vmatpush1.msra.mxu0 %v149
    %1299 = vmatprep.subr.mxu0 %v154
    %1300 = vmatpush1.msra.mxu0 %v153
    %1301 = vmatprep.subr.mxu0 %v158
    %1302 = vmatpush1.msra.mxu0 %v157
    %1303 = vmatprep.subr.mxu0 0.0
    %1304 = vmatpush1.msra.mxu0 0.0
    %1305 = vmatprep.subr.mxu0 0.0
    %1306 = vmatpush1.msra.mxu0 0.0
    %1307 = vmatprep.subr.mxu0 0.0
    %1308 = vmatpush1.msra.mxu0 0.0
    %1309 = vmatprep.subr.mxu0 0.0
    %1310 = vmatpush1.msra.mxu0 0.0
    %1311 = vmatprep.subr.mxu0 0.0
    %1312 = vmatpush1.msra.mxu0 0.0
    %1313 = vmatprep.subr.mxu0 0.0
    %1314 = vmatpush1.msra.mxu0 0.0
    %1315 = vmatprep.subr.mxu0 0.0
    %1316 = vmatpush1.msra.mxu0 0.0
    %1317 = vmatprep.subr.mxu0 0.0
    %1318 = vmatpush1.msra.mxu0 0.0
    %1319 = vmatprep.subr.mxu0 0.0
    %1320 = vmatpush1.msra.mxu0 0.0
    %1321 = vmatprep.subr.mxu0 0.0
    %1322 = vmatpush1.msra.mxu0 0.0
    %1323 = vmatprep.subr.mxu0 0.0
    %1324 = vmatpush1.msra.mxu0 0.0
    %1325 = vmatprep.subr.mxu0 0.0
    %1326 = vmatpush1.msra.mxu0 0.0
    %1327 = vmatprep.subr.mxu0 0.0
    %1328 = vmatpush1.msra.mxu0 0.0
    %1329 = vmatprep.subr.mxu0 0.0
    %1330 = vmatpush1.msra.mxu0 0.0
    %1331 = vmatprep.subr.mxu0 0.0
    %1332 = vmatpush1.msra.mxu0 0.0
    %1333 = vmatprep.subr.mxu0 0.0
    %1334 = vmatpush1.msra.mxu0 0.0
    %1335 = vmatprep.mubr.f32.mxu0 0.0
    %1336 = vmatmul.mubr.f32.gmra.mrb[0].mxu0 %v1167
    %v1337 = vpop.f32.mrb[0].mxu0
    %v1338 = vadd.f32 %v1191, %v1337
    %v1339 = vpop.f32.mrb[0].mxu0
    %v1340 = vadd.f32 %v1195, %v1339
    %1341 = vdwg.mxu0
    %v1342 = vxor.u32 %v1267, 2147483648
    %v1343 = vmul.f32 %v1342, 1.442695
    %v1344 = vpow.pop %v1343
    %v1345 = vadd.f32 %v1344, 1.0
    %v1346 = vrcp.pop %v1345
    %v1347 = vmul.f32 1.0, %v1346
    %v1348 = vxor.u32 %v1269, 2147483648
    %v1349 = vmul.f32 %v1348, 1.442695
    %v1350 = vpow.pop %v1349
    %v1351 = vadd.f32 %v1350, 1.0
    %v1352 = vrcp.pop %v1351
    %v1353 = vmul.f32 1.0, %v1352
    %v1354 = vtanh.pop %v1338
    %v1355 = vxor.u32 %v1340, 2147483648
    %v1356 = vmul.f32 %v1355, 1.442695
    %v1357 = vpow.pop %v1356
    %v1358 = vadd.f32 %v1357, 1.0
    %v1359 = vrcp.pop %v1358
    %v1360 = vmul.f32 1.0, %v1359
    %v1361 = vmul.f32 %v1353, %v1166
    %v1362 = vmul.f32 %v1347, %v1354
    %v1363 = vadd.f32 %v1361, %v1362
    %v1364 = vtanh.pop %v1363
    %v1365 = vmul.f32 %v1360, %v1364
    %p1366 = scmp.lt.s32.totalorder %s1168, 8
    %s1367 = scalar_select %p1366, 1, 0
    %v1368 = vstv %s1367
    %vm1369 = vcmp.eq.s32.totalorder %v1368, 1
    %v1370 = vsel %vm1369, %v1363, %v1166
    %v1371 = vsel %vm1369, %v1365, %v1167
    %s1372 = sadd.s32 %s84, 6
    %s1373 = sld [smem:[#allocation3 + %s1372]]
    %s1374 = sshra.s32 %s1373, 3
    %s1375 = sand.u32 %s1373, 7
    %s1376 = sshra.s32 %s1373, 3
    %s1377 = sand.u32 %s1373, 7
    %s1378 = smul.u32 %s1374, 4
    %s1379 = smul.u32 %s1378, 8
    %s1380 = sadd.s32 %s1379, %s1377
    %s1381 = scalar_lea.vmem [#allocation4], %s1380
    %v1382 = vld [vmem:[%s1381] ss:$8 sm:$0xf]
    %v1384 = vlaneseq
    %v1385 = vshrl.u32 %v1384, 7
    %v1386 = vsub.s32 0, %v1385
    %v1387 = vrot.slane %v1382, %v1386
    %v1388 = vlaneseq
    %v1389 = vshrl.u32 %v1388, 7
    %v1390 = vsub.s32 1, %v1389
    %v1391 = vrot.slane %v1382, %v1390
    %v1392 = vlaneseq
    %v1393 = vshrl.u32 %v1392, 7
    %v1394 = vsub.s32 2, %v1393
    %v1395 = vrot.slane %v1382, %v1394
    %v1396 = vlaneseq
    %v1397 = vshrl.u32 %v1396, 7
    %v1398 = vsub.s32 3, %v1397
    %v1399 = vrot.slane %v1382, %v1398
    %1404 = vmatprep.subr.mxu0 %v96
    %1405 = vmatpush1.msra.mxu0 %v95
    %1406 = vmatprep.subr.mxu0 %v100
    %1407 = vmatpush1.msra.mxu0 %v99
    %1408 = vmatprep.subr.mxu0 %v104
    %1409 = vmatpush1.msra.mxu0 %v103
    %1410 = vmatprep.subr.mxu0 %v108
    %1411 = vmatpush1.msra.mxu0 %v107
    %1412 = vmatprep.subr.mxu0 %v112
    %1413 = vmatpush1.msra.mxu0 %v111
    %1414 = vmatprep.subr.mxu0 %v116
    %1415 = vmatpush1.msra.mxu0 %v115
    %1416 = vmatprep.subr.mxu0 %v120
    %1417 = vmatpush1.msra.mxu0 %v119
    %1418 = vmatprep.subr.mxu0 %v124
    %1419 = vmatpush1.msra.mxu0 %v123
    %1420 = vmatprep.subr.mxu0 %v128
    %1421 = vmatpush1.msra.mxu0 %v127
    %1422 = vmatprep.subr.mxu0 %v132
    %1423 = vmatpush1.msra.mxu0 %v131
    %1424 = vmatprep.subr.mxu0 %v136
    %1425 = vmatpush1.msra.mxu0 %v135
    %1426 = vmatprep.subr.mxu0 %v140
    %1427 = vmatpush1.msra.mxu0 %v139
    %1428 = vmatprep.subr.mxu0 %v144
    %1429 = vmatpush1.msra.mxu0 %v143
    %1430 = vmatprep.subr.mxu0 %v148
    %1431 = vmatpush1.msra.mxu0 %v147
    %1432 = vmatprep.subr.mxu0 %v152
    %1433 = vmatpush1.msra.mxu0 %v151
    %1434 = vmatprep.subr.mxu0 %v156
    %1435 = vmatpush1.msra.mxu0 %v155
    %1436 = vmatprep.subr.mxu0 0.0
    %1437 = vmatpush1.msra.mxu0 0.0
    %1438 = vmatprep.subr.mxu0 0.0
    %1439 = vmatpush1.msra.mxu0 0.0
    %1440 = vmatprep.subr.mxu0 0.0
    %1441 = vmatpush1.msra.mxu0 0.0
    %1442 = vmatprep.subr.mxu0 0.0
    %1443 = vmatpush1.msra.mxu0 0.0
    %1444 = vmatprep.subr.mxu0 0.0
    %1445 = vmatpush1.msra.mxu0 0.0
    %1446 = vmatprep.subr.mxu0 0.0
    %1447 = vmatpush1.msra.mxu0 0.0
    %1448 = vmatprep.subr.mxu0 0.0
    %1449 = vmatpush1.msra.mxu0 0.0
    %1450 = vmatprep.subr.mxu0 0.0
    %1451 = vmatpush1.msra.mxu0 0.0
    %1452 = vmatprep.subr.mxu0 0.0
    %1453 = vmatpush1.msra.mxu0 0.0
    %1454 = vmatprep.subr.mxu0 0.0
    %1455 = vmatpush1.msra.mxu0 0.0
    %1456 = vmatprep.subr.mxu0 0.0
    %1457 = vmatpush1.msra.mxu0 0.0
    %1458 = vmatprep.subr.mxu0 0.0
    %1459 = vmatpush1.msra.mxu0 0.0
    %1460 = vmatprep.subr.mxu0 0.0
    %1461 = vmatpush1.msra.mxu0 0.0
    %1462 = vmatprep.subr.mxu0 0.0
    %1463 = vmatpush1.msra.mxu0 0.0
    %1464 = vmatprep.subr.mxu0 0.0
    %1465 = vmatpush1.msra.mxu0 0.0
    %1466 = vmatprep.subr.mxu0 0.0
    %1467 = vmatpush1.msra.mxu0 0.0
    %1468 = vmatprep.mubr.f32.mxu0 0.0
    %1469 = vmatmul.mubr.f32.gmra.mrb[0].mxu0 %v1371
    %v1470 = vpop.f32.mrb[0].mxu0
    %v1471 = vadd.f32 %v1387, %v1470
    %v1472 = vpop.f32.mrb[0].mxu0
    %v1473 = vadd.f32 %v1391, %v1472
    %1474 = vdwg.mxu0
    %1475 = vmatprep.subr.mxu0 %v98
    %1476 = vmatpush1.msra.mxu0 %v97
    %1477 = vmatprep.subr.mxu0 %v102
    %1478 = vmatpush1.msra.mxu0 %v101
    %1479 = vmatprep.subr.mxu0 %v106
    %1480 = vmatpush1.msra.mxu0 %v105
    %1481 = vmatprep.subr.mxu0 %v110
    %1482 = vmatpush1.msra.mxu0 %v109
    %1483 = vmatprep.subr.mxu0 %v114
    %1484 = vmatpush1.msra.mxu0 %v113
    %1485 = vmatprep.subr.mxu0 %v118
    %1486 = vmatpush1.msra.mxu0 %v117
    %1487 = vmatprep.subr.mxu0 %v122
    %1488 = vmatpush1.msra.mxu0 %v121
    %1489 = vmatprep.subr.mxu0 %v126
    %1490 = vmatpush1.msra.mxu0 %v125
    %1491 = vmatprep.subr.mxu0 %v130
    %1492 = vmatpush1.msra.mxu0 %v129
    %1493 = vmatprep.subr.mxu0 %v134
    %1494 = vmatpush1.msra.mxu0 %v133
    %1495 = vmatprep.subr.mxu0 %v138
    %1496 = vmatpush1.msra.mxu0 %v137
    %1497 = vmatprep.subr.mxu0 %v142
    %1498 = vmatpush1.msra.mxu0 %v141
    %1499 = vmatprep.subr.mxu0 %v146
    %1500 = vmatpush1.msra.mxu0 %v145
    %1501 = vmatprep.subr.mxu0 %v150
    %1502 = vmatpush1.msra.mxu0 %v149
    %1503 = vmatprep.subr.mxu0 %v154
    %1504 = vmatpush1.msra.mxu0 %v153
    %1505 = vmatprep.subr.mxu0 %v158
    %1506 = vmatpush1.msra.mxu0 %v157
    %1507 = vmatprep.subr.mxu0 0.0
    %1508 = vmatpush1.msra.mxu0 0.0
    %1509 = vmatprep.subr.mxu0 0.0
    %1510 = vmatpush1.msra.mxu0 0.0
    %1511 = vmatprep.subr.mxu0 0.0
    %1512 = vmatpush1.msra.mxu0 0.0
    %1513 = vmatprep.subr.mxu0 0.0
    %1514 = vmatpush1.msra.mxu0 0.0
    %1515 = vmatprep.subr.mxu0 0.0
    %1516 = vmatpush1.msra.mxu0 0.0
    %1517 = vmatprep.subr.mxu0 0.0
    %1518 = vmatpush1.msra.mxu0 0.0
    %1519 = vmatprep.subr.mxu0 0.0
    %1520 = vmatpush1.msra.mxu0 0.0
    %1521 = vmatprep.subr.mxu0 0.0
    %1522 = vmatpush1.msra.mxu0 0.0
    %1523 = vmatprep.subr.mxu0 0.0
    %1524 = vmatpush1.msra.mxu0 0.0
    %1525 = vmatprep.subr.mxu0 0.0
    %1526 = vmatpush1.msra.mxu0 0.0
    %1527 = vmatprep.subr.mxu0 0.0
    %1528 = vmatpush1.msra.mxu0 0.0
    %1529 = vmatprep.subr.mxu0 0.0
    %1530 = vmatpush1.msra.mxu0 0.0
    %1531 = vmatprep.subr.mxu0 0.0
    %1532 = vmatpush1.msra.mxu0 0.0
    %1533 = vmatprep.subr.mxu0 0.0
    %1534 = vmatpush1.msra.mxu0 0.0
    %1535 = vmatprep.subr.mxu0 0.0
    %1536 = vmatpush1.msra.mxu0 0.0
    %1537 = vmatprep.subr.mxu0 0.0
    %1538 = vmatpush1.msra.mxu0 0.0
    %1539 = vmatprep.mubr.f32.mxu0 0.0
    %1540 = vmatmul.mubr.f32.gmra.mrb[0].mxu0 %v1371
    %v1541 = vpop.f32.mrb[0].mxu0
    %v1542 = vadd.f32 %v1395, %v1541
    %v1543 = vpop.f32.mrb[0].mxu0
    %v1544 = vadd.f32 %v1399, %v1543
    %1545 = vdwg.mxu0
    %v1546 = vxor.u32 %v1471, 2147483648
    %v1547 = vmul.f32 %v1546, 1.442695
    %v1548 = vpow.pop %v1547
    %v1549 = vadd.f32 %v1548, 1.0
    %v1550 = vrcp.pop %v1549
    %v1551 = vmul.f32 1.0, %v1550
    %v1552 = vxor.u32 %v1473, 2147483648
    %v1553 = vmul.f32 %v1552, 1.442695
    %v1554 = vpow.pop %v1553
    %v1555 = vadd.f32 %v1554, 1.0
    %v1556 = vrcp.pop %v1555
    %v1557 = vmul.f32 1.0, %v1556
    %v1558 = vtanh.pop %v1542
    %v1559 = vxor.u32 %v1544, 2147483648
    %v1560 = vmul.f32 %v1559, 1.442695
    %v1561 = vpow.pop %v1560
    %v1562 = vadd.f32 %v1561, 1.0
    %v1563 = vrcp.pop %v1562
    %v1564 = vmul.f32 1.0, %v1563
    %v1565 = vmul.f32 %v1557, %v1370
    %v1566 = vmul.f32 %v1551, %v1558
    %v1567 = vadd.f32 %v1565, %v1566
    %v1568 = vtanh.pop %v1567
    %v1569 = vmul.f32 %v1564, %v1568
    %p1570 = scmp.lt.s32.totalorder %s1372, 8
    %s1571 = scalar_select %p1570, 1, 0
    %v1572 = vstv %s1571
    %vm1573 = vcmp.eq.s32.totalorder %v1572, 1
    %v1574 = vsel %vm1573, %v1567, %v1370
    %v1575 = vsel %vm1573, %v1569, %v1371
    %s1576 = sadd.s32 %s84, 7
    %s1577 = sld [smem:[#allocation3 + %s1576]]
    %s1578 = sshra.s32 %s1577, 3
    %s1579 = sand.u32 %s1577, 7
    %s1580 = sshra.s32 %s1577, 3
    %s1581 = sand.u32 %s1577, 7
    %s1582 = smul.u32 %s1578, 4
    %s1583 = smul.u32 %s1582, 8
    %s1584 = sadd.s32 %s1583, %s1581
    %s1585 = scalar_lea.vmem [#allocation4], %s1584
    %v1586 = vld [vmem:[%s1585] ss:$8 sm:$0xf]
    %v1588 = vlaneseq
    %v1589 = vshrl.u32 %v1588, 7
    %v1590 = vsub.s32 0, %v1589
    %v1591 = vrot.slane %v1586, %v1590
    %v1592 = vlaneseq
    %v1593 = vshrl.u32 %v1592, 7
    %v1594 = vsub.s32 1, %v1593
    %v1595 = vrot.slane %v1586, %v1594
    %v1596 = vlaneseq
    %v1597 = vshrl.u32 %v1596, 7
    %v1598 = vsub.s32 2, %v1597
    %v1599 = vrot.slane %v1586, %v1598
    %v1600 = vlaneseq
    %v1601 = vshrl.u32 %v1600, 7
    %v1602 = vsub.s32 3, %v1601
    %v1603 = vrot.slane %v1586, %v1602
    %1608 = vmatprep.subr.mxu0 %v96
    %1609 = vmatpush1.msra.mxu0 %v95
    %1610 = vmatprep.subr.mxu0 %v100
    %1611 = vmatpush1.msra.mxu0 %v99
    %1612 = vmatprep.subr.mxu0 %v104
    %1613 = vmatpush1.msra.mxu0 %v103
    %1614 = vmatprep.subr.mxu0 %v108
    %1615 = vmatpush1.msra.mxu0 %v107
    %1616 = vmatprep.subr.mxu0 %v112
    %1617 = vmatpush1.msra.mxu0 %v111
    %1618 = vmatprep.subr.mxu0 %v116
    %1619 = vmatpush1.msra.mxu0 %v115
    %1620 = vmatprep.subr.mxu0 %v120
    %1621 = vmatpush1.msra.mxu0 %v119
    %1622 = vmatprep.subr.mxu0 %v124
    %1623 = vmatpush1.msra.mxu0 %v123
    %1624 = vmatprep.subr.mxu0 %v128
    %1625 = vmatpush1.msra.mxu0 %v127
    %1626 = vmatprep.subr.mxu0 %v132
    %1627 = vmatpush1.msra.mxu0 %v131
    %1628 = vmatprep.subr.mxu0 %v136
    %1629 = vmatpush1.msra.mxu0 %v135
    %1630 = vmatprep.subr.mxu0 %v140
    %1631 = vmatpush1.msra.mxu0 %v139
    %1632 = vmatprep.subr.mxu0 %v144
    %1633 = vmatpush1.msra.mxu0 %v143
    %1634 = vmatprep.subr.mxu0 %v148
    %1635 = vmatpush1.msra.mxu0 %v147
    %1636 = vmatprep.subr.mxu0 %v152
    %1637 = vmatpush1.msra.mxu0 %v151
    %1638 = vmatprep.subr.mxu0 %v156
    %1639 = vmatpush1.msra.mxu0 %v155
    %1640 = vmatprep.subr.mxu0 0.0
    %1641 = vmatpush1.msra.mxu0 0.0
    %1642 = vmatprep.subr.mxu0 0.0
    %1643 = vmatpush1.msra.mxu0 0.0
    %1644 = vmatprep.subr.mxu0 0.0
    %1645 = vmatpush1.msra.mxu0 0.0
    %1646 = vmatprep.subr.mxu0 0.0
    %1647 = vmatpush1.msra.mxu0 0.0
    %1648 = vmatprep.subr.mxu0 0.0
    %1649 = vmatpush1.msra.mxu0 0.0
    %1650 = vmatprep.subr.mxu0 0.0
    %1651 = vmatpush1.msra.mxu0 0.0
    %1652 = vmatprep.subr.mxu0 0.0
    %1653 = vmatpush1.msra.mxu0 0.0
    %1654 = vmatprep.subr.mxu0 0.0
    %1655 = vmatpush1.msra.mxu0 0.0
    %1656 = vmatprep.subr.mxu0 0.0
    %1657 = vmatpush1.msra.mxu0 0.0
    %1658 = vmatprep.subr.mxu0 0.0
    %1659 = vmatpush1.msra.mxu0 0.0
    %1660 = vmatprep.subr.mxu0 0.0
    %1661 = vmatpush1.msra.mxu0 0.0
    %1662 = vmatprep.subr.mxu0 0.0
    %1663 = vmatpush1.msra.mxu0 0.0
    %1664 = vmatprep.subr.mxu0 0.0
    %1665 = vmatpush1.msra.mxu0 0.0
    %1666 = vmatprep.subr.mxu0 0.0
    %1667 = vmatpush1.msra.mxu0 0.0
    %1668 = vmatprep.subr.mxu0 0.0
    %1669 = vmatpush1.msra.mxu0 0.0
    %1670 = vmatprep.subr.mxu0 0.0
    %1671 = vmatpush1.msra.mxu0 0.0
    %1672 = vmatprep.mubr.f32.mxu0 0.0
    %1673 = vmatmul.mubr.f32.gmra.mrb[0].mxu0 %v1575
    %v1674 = vpop.f32.mrb[0].mxu0
    %v1675 = vadd.f32 %v1591, %v1674
    %v1676 = vpop.f32.mrb[0].mxu0
    %v1677 = vadd.f32 %v1595, %v1676
    %1678 = vdwg.mxu0
    %1679 = vmatprep.subr.mxu0 %v98
    %1680 = vmatpush1.msra.mxu0 %v97
    %1681 = vmatprep.subr.mxu0 %v102
    %1682 = vmatpush1.msra.mxu0 %v101
    %1683 = vmatprep.subr.mxu0 %v106
    %1684 = vmatpush1.msra.mxu0 %v105
    %1685 = vmatprep.subr.mxu0 %v110
    %1686 = vmatpush1.msra.mxu0 %v109
    %1687 = vmatprep.subr.mxu0 %v114
    %1688 = vmatpush1.msra.mxu0 %v113
    %1689 = vmatprep.subr.mxu0 %v118
    %1690 = vmatpush1.msra.mxu0 %v117
    %1691 = vmatprep.subr.mxu0 %v122
    %1692 = vmatpush1.msra.mxu0 %v121
    %1693 = vmatprep.subr.mxu0 %v126
    %1694 = vmatpush1.msra.mxu0 %v125
    %1695 = vmatprep.subr.mxu0 %v130
    %1696 = vmatpush1.msra.mxu0 %v129
    %1697 = vmatprep.subr.mxu0 %v134
    %1698 = vmatpush1.msra.mxu0 %v133
    %1699 = vmatprep.subr.mxu0 %v138
    %1700 = vmatpush1.msra.mxu0 %v137
    %1701 = vmatprep.subr.mxu0 %v142
    %1702 = vmatpush1.msra.mxu0 %v141
    %1703 = vmatprep.subr.mxu0 %v146
    %1704 = vmatpush1.msra.mxu0 %v145
    %1705 = vmatprep.subr.mxu0 %v150
    %1706 = vmatpush1.msra.mxu0 %v149
    %1707 = vmatprep.subr.mxu0 %v154
    %1708 = vmatpush1.msra.mxu0 %v153
    %1709 = vmatprep.subr.mxu0 %v158
    %1710 = vmatpush1.msra.mxu0 %v157
    %1711 = vmatprep.subr.mxu0 0.0
    %1712 = vmatpush1.msra.mxu0 0.0
    %1713 = vmatprep.subr.mxu0 0.0
    %1714 = vmatpush1.msra.mxu0 0.0
    %1715 = vmatprep.subr.mxu0 0.0
    %1716 = vmatpush1.msra.mxu0 0.0
    %1717 = vmatprep.subr.mxu0 0.0
    %1718 = vmatpush1.msra.mxu0 0.0
    %1719 = vmatprep.subr.mxu0 0.0
    %1720 = vmatpush1.msra.mxu0 0.0
    %1721 = vmatprep.subr.mxu0 0.0
    %1722 = vmatpush1.msra.mxu0 0.0
    %1723 = vmatprep.subr.mxu0 0.0
    %1724 = vmatpush1.msra.mxu0 0.0
    %1725 = vmatprep.subr.mxu0 0.0
    %1726 = vmatpush1.msra.mxu0 0.0
    %1727 = vmatprep.subr.mxu0 0.0
    %1728 = vmatpush1.msra.mxu0 0.0
    %1729 = vmatprep.subr.mxu0 0.0
    %1730 = vmatpush1.msra.mxu0 0.0
    %1731 = vmatprep.subr.mxu0 0.0
    %1732 = vmatpush1.msra.mxu0 0.0
    %1733 = vmatprep.subr.mxu0 0.0
    %1734 = vmatpush1.msra.mxu0 0.0
    %1735 = vmatprep.subr.mxu0 0.0
    %1736 = vmatpush1.msra.mxu0 0.0
    %1737 = vmatprep.subr.mxu0 0.0
    %1738 = vmatpush1.msra.mxu0 0.0
    %1739 = vmatprep.subr.mxu0 0.0
    %1740 = vmatpush1.msra.mxu0 0.0
    %1741 = vmatprep.subr.mxu0 0.0
    %1742 = vmatpush1.msra.mxu0 0.0
    %1743 = vmatprep.mubr.f32.mxu0 0.0
    %1744 = vmatmul.mubr.f32.gmra.mrb[0].mxu0 %v1575
    %v1745 = vpop.f32.mrb[0].mxu0
    %v1746 = vadd.f32 %v1599, %v1745
    %v1747 = vpop.f32.mrb[0].mxu0
    %v1748 = vadd.f32 %v1603, %v1747
    %1749 = vdwg.mxu0
    %v1750 = vxor.u32 %v1675, 2147483648
    %v1751 = vmul.f32 %v1750, 1.442695
    %v1752 = vpow.pop %v1751
    %v1753 = vadd.f32 %v1752, 1.0
    %v1754 = vrcp.pop %v1753
    %v1755 = vmul.f32 1.0, %v1754
    %v1756 = vxor.u32 %v1677, 2147483648
    %v1757 = vmul.f32 %v1756, 1.442695
    %v1758 = vpow.pop %v1757
    %v1759 = vadd.f32 %v1758, 1.0
    %v1760 = vrcp.pop %v1759
    %v1761 = vmul.f32 1.0, %v1760
    %v1762 = vtanh.pop %v1746
    %v1763 = vxor.u32 %v1748, 2147483648
    %v1764 = vmul.f32 %v1763, 1.442695
    %v1765 = vpow.pop %v1764
    %v1766 = vadd.f32 %v1765, 1.0
    %v1767 = vrcp.pop %v1766
    %v1768 = vmul.f32 1.0, %v1767
    %v1769 = vmul.f32 %v1761, %v1574
    %v1770 = vmul.f32 %v1755, %v1762
    %v1771 = vadd.f32 %v1769, %v1770
    %v1772 = vtanh.pop %v1771
    %v1773 = vmul.f32 %v1768, %v1772
    %p1774 = scmp.lt.s32.totalorder %s1576, 8
    %s1775 = scalar_select %p1774, 1, 0
    %v1776 = vstv %s1775
    %vm1777 = vcmp.eq.s32.totalorder %v1776, 1
    %v1778 = vsel %vm1777, %v1771, %v1574
    %v1779 = vsel %vm1777, %v1773, %v1575
    %1780 = vst [vmem:[#allocation11] sm:$0x1] %v1779
    %1781 = vst [vmem:[#allocation13] sm:$0x1] %v1778
    %v1783 = vrot.slane %v555, 7
    %v1786 = vrot.slane %v759, 6
    %v1789 = vrot.slane %v963, 5
    %v1792 = vrot.slane %v1167, 4
    %v1795 = vrot.slane %v1371, 3
    %v1798 = vrot.slane %v1575, 2
    %v1801 = vrot.slane %v1779, 1
    %vm1803 = vcmask 1040384
    %v1804 = vsel %vm1803, %v351, %v1783
    %vm1805 = vcmask 1041408
    %v1806 = vsel %vm1805, %v1804, %v1786
    %vm1807 = vcmask 1042432
    %v1808 = vsel %vm1807, %v1806, %v1789
    %vm1809 = vcmask 1043456
    %v1810 = vsel %vm1809, %v1808, %v1792
    %vm1811 = vcmask 1044480
    %v1812 = vsel %vm1811, %v1810, %v1795
    %vm1813 = vcmask 1045504
    %v1814 = vsel %vm1813, %v1812, %v1798
    %vm1815 = vcmask 1046528
    %v1816 = vsel %vm1815, %v1814, %v1801
    %v1817 = vld [vmem:[#allocation9] sm:$0xff]
    %v1818 = vld [vmem:[#allocation9 + $0x8] sm:$0xff]
    %v1819 = vld [vmem:[#allocation9 + $0x10] sm:$0xff]
    %v1820 = vld [vmem:[#allocation9 + $0x18] sm:$0xff]
    %v1821 = vld [vmem:[#allocation9 + $0x20] sm:$0xff]
    %v1822 = vld [vmem:[#allocation9 + $0x28] sm:$0xff]
    %v1823 = vld [vmem:[#allocation9 + $0x30] sm:$0xff]
    %v1824 = vld [vmem:[#allocation9 + $0x38] sm:$0xff]
    %v1825 = vld [vmem:[#allocation9 + $0x40] sm:$0xff]
    %v1826 = vld [vmem:[#allocation9 + $0x48] sm:$0xff]
    %v1827 = vld [vmem:[#allocation9 + $0x50] sm:$0xff]
    %v1828 = vld [vmem:[#allocation9 + $0x58] sm:$0xff]
    %v1829 = vld [vmem:[#allocation9 + $0x60] sm:$0xff]
    %v1830 = vld [vmem:[#allocation9 + $0x68] sm:$0xff]
    %v1831 = vld [vmem:[#allocation9 + $0x70] sm:$0xff]
    %v1832 = vld [vmem:[#allocation9 + $0x78] sm:$0xff]
    %v1833 = vld [vmem:[%s6] sm:$0x1]
    %v1835 = vlaneseq
    %v1836 = vshrl.u32 %v1835, 7
    %v1837 = vsub.s32 0, %v1836
    %v1838 = vrot.slane %v1833, %v1837
    %1840 = vmatprep.subr.mxu0 0.0
    %1841 = vmatpush1.msra.mxu0 %v1817
    %1842 = vmatprep.subr.mxu0 0.0
    %1843 = vmatpush1.msra.mxu0 %v1818
    %1844 = vmatprep.subr.mxu0 0.0
    %1845 = vmatpush1.msra.mxu0 %v1819
    %1846 = vmatprep.subr.mxu0 0.0
    %1847 = vmatpush1.msra.mxu0 %v1820
    %1848 = vmatprep.subr.mxu0 0.0
    %1849 = vmatpush1.msra.mxu0 %v1821
    %1850 = vmatprep.subr.mxu0 0.0
    %1851 = vmatpush1.msra.mxu0 %v1822
    %1852 = vmatprep.subr.mxu0 0.0
    %1853 = vmatpush1.msra.mxu0 %v1823
    %1854 = vmatprep.subr.mxu0 0.0
    %1855 = vmatpush1.msra.mxu0 %v1824
    %1856 = vmatprep.subr.mxu0 0.0
    %1857 = vmatpush1.msra.mxu0 %v1825
    %1858 = vmatprep.subr.mxu0 0.0
    %1859 = vmatpush1.msra.mxu0 %v1826
    %1860 = vmatprep.subr.mxu0 0.0
    %1861 = vmatpush1.msra.mxu0 %v1827
    %1862 = vmatprep.subr.mxu0 0.0
    %1863 = vmatpush1.msra.mxu0 %v1828
    %1864 = vmatprep.subr.mxu0 0.0
    %1865 = vmatpush1.msra.mxu0 %v1829
    %1866 = vmatprep.subr.mxu0 0.0
    %1867 = vmatpush1.msra.mxu0 %v1830
    %1868 = vmatprep.subr.mxu0 0.0
    %1869 = vmatpush1.msra.mxu0 %v1831
    %1870 = vmatprep.subr.mxu0 0.0
    %1871 = vmatpush1.msra.mxu0 %v1832
    %1872 = vmatprep.subr.mxu0 0.0
    %1873 = vmatpush1.msra.mxu0 0.0
    %1874 = vmatprep.subr.mxu0 0.0
    %1875 = vmatpush1.msra.mxu0 0.0
    %1876 = vmatprep.subr.mxu0 0.0
    %1877 = vmatpush1.msra.mxu0 0.0
    %1878 = vmatprep.subr.mxu0 0.0
    %1879 = vmatpush1.msra.mxu0 0.0
    %1880 = vmatprep.subr.mxu0 0.0
    %1881 = vmatpush1.msra.mxu0 0.0
    %1882 = vmatprep.subr.mxu0 0.0
    %1883 = vmatpush1.msra.mxu0 0.0
    %1884 = vmatprep.subr.mxu0 0.0
    %1885 = vmatpush1.msra.mxu0 0.0
    %1886 = vmatprep.subr.mxu0 0.0
    %1887 = vmatpush1.msra.mxu0 0.0
    %1888 = vmatprep.subr.mxu0 0.0
    %1889 = vmatpush1.msra.mxu0 0.0
    %1890 = vmatprep.subr.mxu0 0.0
    %1891 = vmatpush1.msra.mxu0 0.0
    %1892 = vmatprep.subr.mxu0 0.0
    %1893 = vmatpush1.msra.mxu0 0.0
    %1894 = vmatprep.subr.mxu0 0.0
    %1895 = vmatpush1.msra.mxu0 0.0
    %1896 = vmatprep.subr.mxu0 0.0
    %1897 = vmatpush1.msra.mxu0 0.0
    %1898 = vmatprep.subr.mxu0 0.0
    %1899 = vmatpush1.msra.mxu0 0.0
    %1900 = vmatprep.subr.mxu0 0.0
    %1901 = vmatpush1.msra.mxu0 0.0
    %1902 = vmatprep.subr.mxu0 0.0
    %1903 = vmatpush1.msra.mxu0 0.0
    %1904 = vmatprep.mubr.f32.mxu0 0.0
    %1905 = vmatmul.mubr.f32.gmra.mrb[0].mxu0 %v1816
    %v1906 = vpop.f32.mrb[0].mxu0
    %v1907 = vadd.f32 %v1838, %v1906
    %v1908 = vpop.f32.mrb[0].mxu0
    %1909 = vdwg.mxu0
    %1910 = vst [vmem:[#allocation10] sm:$0xff] %v1907
    // Predicated region
    $region42: #{tpu_custom_call.1} parent=1 // pred_check
      _
    $region43: #{tpu_custom_call.1} parent=1 // pred_check_branch
      %1912 = sbr.rel (0) target = $region45
    $region44: #{tpu_custom_call.1} parent=1 // pred_region
      %s1914 = ssub.s32 128, 128
      %1915 = vsyncadd [#allocation6], %s1914
      %s1917 = sshll.u32 [#allocation10], 4
      %s1918 = int_to_ptr.vmem [resolvable:$true] %s1917
      %1920 = dma.vmem_to_hbm [thread:$0]  %s1918, 128, %s7, [#allocation6]
    $region45: #{tpu_custom_call.1} parent=1 // pred_fallthru
      _
    // Predicated region
    $region46: #{tpu_custom_call.1} parent=1 // pred_check
      _
    $region47: #{tpu_custom_call.1} parent=1 // pred_check_branch
      %1922 = sbr.rel (0) target = $region49
    $region48: #{tpu_custom_call.1} parent=1 // pred_region
      %s1924 = ssub.s32 16, 16
      %1925 = vsyncadd [#allocation12], %s1924
      %s1927 = sshll.u32 [#allocation11], 4
      %s1928 = int_to_ptr.vmem [resolvable:$true] %s1927
      %1930 = dma.vmem_to_hbm [thread:$0]  %s1928, 16, %s8, [#allocation12]
    $region49: #{tpu_custom_call.1} parent=1 // pred_fallthru
      _
    // Predicated region
    $region50: #{tpu_custom_call.1} parent=1 // pred_check
      _
    $region51: #{tpu_custom_call.1} parent=1 // pred_check_branch
      %1932 = sbr.rel (0) target = $region53
    $region52: #{tpu_custom_call.1} parent=1 // pred_region
      %s1934 = ssub.s32 16, 16
      %1935 = vsyncadd [#allocation12], %s1934
      %s1937 = sshll.u32 [#allocation13], 4
      %s1938 = int_to_ptr.vmem [resolvable:$true] %s1937
      %1940 = dma.vmem_to_hbm [thread:$0]  %s1938, 16, %s9, [#allocation12]
    $region53: #{tpu_custom_call.1} parent=1 // pred_fallthru
      _
    // Predicated region
    $region54: #{tpu_custom_call.1} parent=1 // pred_check
      _
    $region55: #{tpu_custom_call.1} parent=1 // pred_check_branch
      %1942 = sbr.rel (0) target = $region57
    $region56: #{tpu_custom_call.1} parent=1 // pred_region
      %1943 = dma.done [#allocation6], 128
    $region57: #{tpu_custom_call.1} parent=1 // pred_fallthru
      _
    // Predicated region
    $region58: #{tpu_custom_call.1} parent=1 // pred_check
      _
    $region59: #{tpu_custom_call.1} parent=1 // pred_check_branch
      %1945 = sbr.rel (0) target = $region61
    $region60: #{tpu_custom_call.1} parent=1 // pred_region
      %1946 = dma.done [#allocation12], 16
    $region61: #{tpu_custom_call.1} parent=1 // pred_fallthru
      _
    // Predicated region
    $region62: #{tpu_custom_call.1} parent=1 // pred_check
      _
    $region63: #{tpu_custom_call.1} parent=1 // pred_check_branch
      %1948 = sbr.rel (0) target = $region65
    $region64: #{tpu_custom_call.1} parent=1 // pred_region
      %1949 = dma.done [#allocation12], 16
    $region65: #{tpu_custom_call.1} parent=1 // pred_fallthru
      _
    %1950 = vsyncpa [#allocation5], 1
    %1951 = vsyncpa [#allocation8], 1
    %1952 = vsyncpa [#allocation6], 1
    %1953 = vsyncpa [#allocation12], 1

</llo_original>
